<compile_context>
chip_gen: v7x
topology: tpu7x:2x2x1
jax: 0.10.0
libtpu: 0.0.40
codegen_flags: <defaults>
</compile_context>

<pallas_src>
import jax
import jax.numpy as jnp
from jax import lax
from jax.experimental import pallas as pl
from jax.experimental.pallas import tpu as pltpu


def _round_up(v, m):
    return ((v + m - 1) // m) * m


# ---------------------------------------------------------------------------
# Dense-matrix forms of the (1->1 channel) conv / transposed conv.
# Pure layout math on params; done ONCE outside the jitted forward.
# ---------------------------------------------------------------------------
def _conv_as_matrix(w, I, K, S):
    """M s.t. vec(conv2d(x, w, stride=S, pad=0)) = vec(x) @ M  (square x)."""
    oh = (I - K) // S + 1
    ii = jnp.arange(I)
    oo = jnp.arange(oh)
    k = ii[:, None] - S * oo[None, :]                 # (I, oh) kernel tap idx
    valid = (k >= 0) & (k < K)
    kc = jnp.clip(k, 0, K - 1)
    m4 = w[kc[:, :, None, None], kc[None, None, :, :]]           # (I,oh,I,oh)
    m4 = jnp.where(valid[:, :, None, None] & valid[None, None, :, :], m4, 0.0)
    return m4.transpose(0, 2, 1, 3).reshape(I * I, oh * oh)


def _deconv_as_matrix(w, n, K, S, OP):
    """M s.t. vec(conv_transpose2d(x, w, stride=S, pad=0, out_pad=OP))
       = vec(x) @ M, for a square (n, n) input."""
    OH = (n - 1) * S + K + OP
    ii = jnp.arange(n)
    oo = jnp.arange(OH)
    k = oo[None, :] - S * ii[:, None]                 # (n, OH) kernel tap idx
    valid = (k >= 0) & (k < K)
    kc = jnp.clip(k, 0, K - 1)
    m4 = w[kc[:, :, None, None], kc[None, None, :, :]]           # (n,OH,n,OH)
    m4 = jnp.where(valid[:, :, None, None] & valid[None, None, :, :], m4, 0.0)
    return m4.transpose(0, 2, 1, 3).reshape(n * n, OH * OH)


def pack_params(params, input_dim):
    """Raw module params -> (w_slab bf16, b_slab f32, static meta).

    Hoisted out of the jitted forward so the gather/where/transpose graph that
    builds the conv / deconv matrices is not re-executed per call.
    """
    K, S, OP = 5, 2, 1
    I = input_dim
    oh = (I - K) // S + 1
    OH = (oh - 1) * S + K + OP

    wc = _conv_as_matrix(params["conv_w"].astype(jnp.float32), I, K, S)
    wd = _deconv_as_matrix(params["deconv_w"].astype(jnp.float32), oh, K, S, OP)

    mats = [wc, params["enc1_w"], params["enc2_w"], params["bott_w"],
            params["dec2_w"], params["dec1_w"], params["rec_w"], wd]
    biases = [jnp.broadcast_to(params["conv_b"], (oh * oh,)),
              params["enc1_b"], params["enc2_b"], params["bott_b"],
              params["dec2_b"], params["dec1_b"], params["rec_b"],
              jnp.broadcast_to(params["deconv_b"], (OH * OH,))]

    n_cols = _round_up(max(m.shape[1] for m in mats), 128)
    layers = []                                   # (row_off, K_i, N_i) static
    rows = []
    off = 0
    for m in mats:
        k_i, n_i = m.shape
        kp = _round_up(k_i, 8)                    # sublane-multiple rows
        rows.append(jnp.pad(m.astype(jnp.float32),
                            ((0, kp - k_i), (0, n_cols - n_i))))
        layers.append((off, k_i, n_i))
        off += kp
    w_slab = jnp.concatenate(rows, axis=0).astype(jnp.bfloat16)

    b_slab = jnp.zeros((_round_up(len(biases), 8), n_cols), jnp.float32)
    for i, b in enumerate(biases):
        b_slab = b_slab.at[i, : b.shape[0]].set(b.astype(jnp.float32))

    meta = dict(layers=tuple(layers), in_cols=I * I, out_cols=OH * OH, OH=OH)
    return w_slab, b_slab, meta


# ---------------------------------------------------------------------------
# Fused forward kernel: 8 matmuls (+ bias, ReLU), everything VMEM-resident.
# ---------------------------------------------------------------------------
def _make_kernel(layers, BM, sub_rows):
    n_layers = len(layers)

    def kernel(x_ref, w_ref, b_ref, out_ref):
        def layer(a_bf16, idx, relu):
            off, k_i, n_i = layers[idx]
            w = w_ref[off:off + k_i, 0:n_i]            # bf16, static ref view
            b = b_ref[idx:idx + 1, 0:n_i]              # f32 (1, N_i)
            y = jnp.dot(a_bf16, w, preferred_element_type=jnp.float32) + b
            return jnp.maximum(y, 0.0) if relu else y

        a = x_ref[...]                                 # bf16 (BM, I*I)
        for idx in range(n_layers - 1):                # conv + 6 linears, ReLU
            a = layer(a, idx, relu=True).astype(jnp.bfloat16)
        # Final ConvT matmul in 128-row sub-tiles: bounds vreg pressure of the
        # (BM, OH*OH) f32 epilogue; stores stay 256 lanes wide (unmasked vst).
        for s in range(0, BM, sub_rows):
            out_ref[s:s + sub_rows, :] = layer(
                a[s:s + sub_rows, :], n_layers - 1, relu=False)

    return kernel


def _preferred_row_tile():
    """MXU pass height: 128 on v2-v5, 256 on v6e/v7x."""
    try:
        kind = jax.devices()[0].device_kind.lower()
    except Exception:
        return 128
    if any(t in kind for t in ("v2", "v3", "v4", "v5")):
        return 128
    return 256


# ---------------------------------------------------------------------------
# Pallas forward (one kernel launch for the whole network)
# ---------------------------------------------------------------------------
def make_forward(meta, *, row_tile=None):
    layers = meta["layers"]
    in_cols, out_cols, OH = meta["in_cols"], meta["out_cols"], meta["OH"]
    BM = row_tile if row_tile is not None else _preferred_row_tile()
    sub_rows = min(BM, 128)
    kernel = _make_kernel(layers, BM, sub_rows)
    flops_per_row = 2 * sum(k * n for _, k, n in layers)

    @jax.jit
    def forward(x, w_slab, b_slab):
        B, C, H, W = x.shape
        assert C == 1 and H * W == in_cols
        x_flat = x.reshape(B, in_cols).astype(jnp.bfloat16)   # halve x bytes
        Bp = _round_up(B, BM)
        if Bp != B:
            # Padded rows produce bias/ReLU garbage downstream; harmless since
            # they are sliced off below and never reduced over.
            x_flat = jnp.pad(x_flat, ((0, Bp - B), (0, 0)))
        n_tiles = Bp // BM          # >= 2 tiles => both v7x TCs get work

        cost = pl.CostEstimate(
            flops=flops_per_row * Bp,
            transcendentals=0,
            bytes_accessed=(x_flat.size * 2 + Bp * out_cols * 4
                            + w_slab.size * 2 + b_slab.size * 4))

        out = pl.pallas_call(
            kernel,
            out_shape=jax.ShapeDtypeStruct((Bp, out_cols), jnp.float32),
            grid=(n_tiles,),
            in_specs=[pl.BlockSpec((BM, in_cols), lambda i: (i, 0)),
                      pl.BlockSpec(w_slab.shape, lambda i: (0, 0)),
                      pl.BlockSpec(b_slab.shape, lambda i: (0, 0))],
            out_specs=pl.BlockSpec((BM, out_cols), lambda i: (i, 0)),
            compiler_params=pltpu.CompilerParams(
                dimension_semantics=("parallel",)),
            cost_estimate=cost,
        )(x_flat, w_slab, b_slab)
        return out[:B].reshape(B, 1, OH, OH)

    return forward


# ---------------------------------------------------------------------------
# Independent pure-JAX/XLA reference (f32, HIGHEST precision, real convs)
# ---------------------------------------------------------------------------
def forward_reference(x, params):
    B = x.shape[0]
    K, S, OP = 5, 2, 1
    dn = ("NCHW", "OIHW", "NCHW")
    hp = lax.Precision.HIGHEST

    wc = params["conv_w"].reshape(1, 1, K, K).astype(jnp.float32)
    y = lax.conv_general_dilated(x.astype(jnp.float32), wc, (S, S), "VALID",
                                 dimension_numbers=dn, precision=hp)
    y = jax.nn.relu(y + params["conv_b"].reshape(1, 1, 1, 1))
    oh = y.shape[-1]

    def lin(v, w, b, relu=True):
        o = jnp.dot(v, w, precision=hp) + b
        return jax.nn.relu(o) if relu else o

    h = y.reshape(B, -1)
    h = lin(h, params["enc1_w"], params["enc1_b"])
    h = lin(h, params["enc2_w"], params["enc2_b"])
    z = lin(h, params["bott_w"], params["bott_b"])
    d = lin(z, params["dec2_w"], params["dec2_b"])
    d = lin(d, params["dec1_w"], params["dec1_b"])
    r = lin(d, params["rec_w"], params["rec_b"])
    r = r.reshape(B, 1, oh, oh)

    # ConvTranspose2d(k,S,pad=0,out_pad=1) == lhs-dilated correlation with the
    # spatially flipped kernel, padded (K-1, K-1+OP) per side.
    wd = params["deconv_w"][::-1, ::-1].reshape(1, 1, K, K).astype(jnp.float32)
    pad = (K - 1, K - 1 + OP)
    out = lax.conv_general_dilated(r, wd, (1, 1), (pad, pad),
                                   lhs_dilation=(S, S),
                                   dimension_numbers=dn, precision=hp)
    return out + params["deconv_b"].reshape(1, 1, 1, 1)


# ---------------------------------------------------------------------------
# Deterministic PyTorch-style parameter init
# ---------------------------------------------------------------------------
def init_params(key, input_dim, h1, h2, latent):
    K = 5
    oh = (input_dim - K) // 2 + 1
    conv_feats = oh * oh

    def uni(k, shape, fan_in):
        bound = 1.0 / (float(fan_in) ** 0.5)
        return jax.random.uniform(k, shape, jnp.float32, -bound, bound)

    keys = jax.random.split(key, 16)
    p = {}
    p["conv_w"] = uni(keys[0], (K, K), K * K)        # Conv2d(1,1,5,5)
    p["conv_b"] = uni(keys[1], (1,), K * K)

    def lin(ki, kb, fin, fout):
        return uni(ki, (fin, fout), fin), uni(kb, (fout,), fin)

    p["enc1_w"], p["enc1_b"] = lin(keys[2], keys[3], conv_feats, h1)
    p["enc2_w"], p["enc2_b"] = lin(keys[4], keys[5], h1, h2)
    p["bott_w"], p["bott_b"] = lin(keys[6], keys[7], h2, latent)
    p["dec2_w"], p["dec2_b"] = lin(keys[8], keys[9], latent, h2)
    p["dec1_w"], p["dec1_b"] = lin(keys[10], keys[11], h2, h1)
    p["rec_w"], p["rec_b"] = lin(keys[12], keys[13], h1, conv_feats)
    p["deconv_w"] = uni(keys[14], (K, K), K * K)     # ConvTranspose2d(1,1,5,5)
    p["deconv_b"] = uni(keys[15], (1,), K * K)
    return p


if __name__ == "__main__":
    # input_dimensions=16 -> out_feats1 = (16-5)//2 + 1 = 6, convo_out_feats =
    # 36, ConvTranspose output 16x16.  Small hidden dims for the demo.
    B, I = 2, 16
    h1, h2, latent = 64, 48, 32

    key = jax.random.PRNGKey(0)
    kx, kp = jax.random.split(key)
    x = jax.random.normal(kx, (B, 1, I, I), jnp.float32)
    params = init_params(kp, I, h1, h2, latent)

    # Pack once, outside jit (perf review: hoist conv-matrix construction).
    w_slab, b_slab, meta = pack_params(params, I)
    fwd = make_forward(meta)

    out = jax.block_until_ready(fwd(x, w_slab, b_slab))
    ref = jax.block_until_ready(forward_reference(x, params))

    assert out.shape == (B, 1, I, I), out.shape
    assert bool(jnp.all(jnp.isfinite(out)))
    # Documented bf16-MXU-operand tolerance vs the f32/HIGHEST reference.
    assert bool(jnp.allclose(out, ref, rtol=5e-2, atol=5e-2)), \
        float(jnp.max(jnp.abs(out - ref)))
    print("KERNEL_OK")
</pallas_src>

<mosaic_0001>
module attributes {stable_mosaic.version = 11 : i64} {
  func.func @kernel(%arg0: i32, %arg1: memref<256x256xbf16, #tpu.memory_space<vmem>>, %arg2: memref<592x256xbf16, #tpu.memory_space<vmem>>, %arg3: memref<8x256xf32, #tpu.memory_space<vmem>>, %arg4: memref<256x256xf32, #tpu.memory_space<vmem>>) attributes {dimension_semantics = [#tpu.dimension_semantics<parallel>], iteration_bounds = array<i64: 1>, scalar_prefetch = 0 : i64, scratch_operands = 0 : i64, tpu.core_type = #tpu.core_type<tc>, window_params = [{transform_indices = @transform_0, window_bounds = array<i64: 256, 256>}, {pipeline_mode = #tpu.pipeline_mode<synchronous>, transform_indices = @transform_1, window_bounds = array<i64: 592, 256>}, {pipeline_mode = #tpu.pipeline_mode<synchronous>, transform_indices = @transform_2, window_bounds = array<i64: 8, 256>}, {transform_indices = @transform_3, window_bounds = array<i64: 256, 256>}]} {
    %c0 = arith.constant 0 : index
    %c0_0 = arith.constant 0 : index
    %0 = vector.load %arg1[%c0, %c0_0] : memref<256x256xbf16, #tpu.memory_space<vmem>>, vector<256x256xbf16>
    %c0_1 = arith.constant 0 : index
    %c0_2 = arith.constant 0 : index
    %1 = vector.load %arg2[%c0_1, %c0_2] : memref<592x256xbf16, #tpu.memory_space<vmem>>, vector<256x36xbf16>
    %c0_3 = arith.constant 0 : index
    %c0_4 = arith.constant 0 : index
    %2 = vector.load %arg3[%c0_3, %c0_4] : memref<8x256xf32, #tpu.memory_space<vmem>>, vector<1x36xf32>
    %cst = arith.constant dense<0.000000e+00> : vector<256x36xf32>
    %3 = tpu.matmul %0, %1, %cst {dimension_numbers = #tpu.dot_dimension_numbers<[1], [0], [0], [1], [0, 0, 1, 1], [], []>} : vector<256x256xbf16>, vector<256x36xbf16>, vector<256x36xf32> -> vector<256x36xf32>
    %4 = vector.broadcast %2 : vector<1x36xf32> to vector<256x36xf32>
    %5 = arith.addf %3, %4 : vector<256x36xf32>
    %cst_5 = arith.constant 0.000000e+00 : f32
    %6 = vector.broadcast %cst_5 : f32 to vector<256x36xf32>
    %7 = arith.maximumf %5, %6 : vector<256x36xf32>
    %8 = arith.truncf %7 : vector<256x36xf32> to vector<256x36xbf16>
    %c256 = arith.constant 256 : index
    %c0_6 = arith.constant 0 : index
    %9 = vector.load %arg2[%c256, %c0_6] : memref<592x256xbf16, #tpu.memory_space<vmem>>, vector<36x64xbf16>
    %c1 = arith.constant 1 : index
    %c0_7 = arith.constant 0 : index
    %10 = vector.load %arg3[%c1, %c0_7] : memref<8x256xf32, #tpu.memory_space<vmem>>, vector<1x64xf32>
    %cst_8 = arith.constant dense<0.000000e+00> : vector<256x64xf32>
    %11 = tpu.matmul %8, %9, %cst_8 {dimension_numbers = #tpu.dot_dimension_numbers<[1], [0], [0], [1], [0, 0, 1, 1], [], []>} : vector<256x36xbf16>, vector<36x64xbf16>, vector<256x64xf32> -> vector<256x64xf32>
    %12 = vector.broadcast %10 : vector<1x64xf32> to vector<256x64xf32>
    %13 = arith.addf %11, %12 : vector<256x64xf32>
    %cst_9 = arith.constant 0.000000e+00 : f32
    %14 = vector.broadcast %cst_9 : f32 to vector<256x64xf32>
    %15 = arith.maximumf %13, %14 : vector<256x64xf32>
    %16 = arith.truncf %15 : vector<256x64xf32> to vector<256x64xbf16>
    %c296 = arith.constant 296 : index
    %c0_10 = arith.constant 0 : index
    %17 = vector.load %arg2[%c296, %c0_10] : memref<592x256xbf16, #tpu.memory_space<vmem>>, vector<64x48xbf16>
    %c2 = arith.constant 2 : index
    %c0_11 = arith.constant 0 : index
    %18 = vector.load %arg3[%c2, %c0_11] : memref<8x256xf32, #tpu.memory_space<vmem>>, vector<1x48xf32>
    %cst_12 = arith.constant dense<0.000000e+00> : vector<256x48xf32>
    %19 = tpu.matmul %16, %17, %cst_12 {dimension_numbers = #tpu.dot_dimension_numbers<[1], [0], [0], [1], [0, 0, 1, 1], [], []>} : vector<256x64xbf16>, vector<64x48xbf16>, vector<256x48xf32> -> vector<256x48xf32>
    %20 = vector.broadcast %18 : vector<1x48xf32> to vector<256x48xf32>
    %21 = arith.addf %19, %20 : vector<256x48xf32>
    %cst_13 = arith.constant 0.000000e+00 : f32
    %22 = vector.broadcast %cst_13 : f32 to vector<256x48xf32>
    %23 = arith.maximumf %21, %22 : vector<256x48xf32>
    %24 = arith.truncf %23 : vector<256x48xf32> to vector<256x48xbf16>
    %c360 = arith.constant 360 : index
    %c0_14 = arith.constant 0 : index
    %25 = vector.load %arg2[%c360, %c0_14] : memref<592x256xbf16, #tpu.memory_space<vmem>>, vector<48x32xbf16>
    %c3 = arith.constant 3 : index
    %c0_15 = arith.constant 0 : index
    %26 = vector.load %arg3[%c3, %c0_15] : memref<8x256xf32, #tpu.memory_space<vmem>>, vector<1x32xf32>
    %cst_16 = arith.constant dense<0.000000e+00> : vector<256x32xf32>
    %27 = tpu.matmul %24, %25, %cst_16 {dimension_numbers = #tpu.dot_dimension_numbers<[1], [0], [0], [1], [0, 0, 1, 1], [], []>} : vector<256x48xbf16>, vector<48x32xbf16>, vector<256x32xf32> -> vector<256x32xf32>
    %28 = vector.broadcast %26 : vector<1x32xf32> to vector<256x32xf32>
    %29 = arith.addf %27, %28 : vector<256x32xf32>
    %cst_17 = arith.constant 0.000000e+00 : f32
    %30 = vector.broadcast %cst_17 : f32 to vector<256x32xf32>
    %31 = arith.maximumf %29, %30 : vector<256x32xf32>
    %32 = arith.truncf %31 : vector<256x32xf32> to vector<256x32xbf16>
    %c408 = arith.constant 408 : index
    %c0_18 = arith.constant 0 : index
    %33 = vector.load %arg2[%c408, %c0_18] : memref<592x256xbf16, #tpu.memory_space<vmem>>, vector<32x48xbf16>
    %c4 = arith.constant 4 : index
    %c0_19 = arith.constant 0 : index
    %34 = vector.load %arg3[%c4, %c0_19] : memref<8x256xf32, #tpu.memory_space<vmem>>, vector<1x48xf32>
    %cst_20 = arith.constant dense<0.000000e+00> : vector<256x48xf32>
    %35 = tpu.matmul %32, %33, %cst_20 {dimension_numbers = #tpu.dot_dimension_numbers<[1], [0], [0], [1], [0, 0, 1, 1], [], []>} : vector<256x32xbf16>, vector<32x48xbf16>, vector<256x48xf32> -> vector<256x48xf32>
    %36 = vector.broadcast %34 : vector<1x48xf32> to vector<256x48xf32>
    %37 = arith.addf %35, %36 : vector<256x48xf32>
    %cst_21 = arith.constant 0.000000e+00 : f32
    %38 = vector.broadcast %cst_21 : f32 to vector<256x48xf32>
    %39 = arith.maximumf %37, %38 : vector<256x48xf32>
    %40 = arith.truncf %39 : vector<256x48xf32> to vector<256x48xbf16>
    %c440 = arith.constant 440 : index
    %c0_22 = arith.constant 0 : index
    %41 = vector.load %arg2[%c440, %c0_22] : memref<592x256xbf16, #tpu.memory_space<vmem>>, vector<48x64xbf16>
    %c5 = arith.constant 5 : index
    %c0_23 = arith.constant 0 : index
    %42 = vector.load %arg3[%c5, %c0_23] : memref<8x256xf32, #tpu.memory_space<vmem>>, vector<1x64xf32>
    %cst_24 = arith.constant dense<0.000000e+00> : vector<256x64xf32>
    %43 = tpu.matmul %40, %41, %cst_24 {dimension_numbers = #tpu.dot_dimension_numbers<[1], [0], [0], [1], [0, 0, 1, 1], [], []>} : vector<256x48xbf16>, vector<48x64xbf16>, vector<256x64xf32> -> vector<256x64xf32>
    %44 = vector.broadcast %42 : vector<1x64xf32> to vector<256x64xf32>
    %45 = arith.addf %43, %44 : vector<256x64xf32>
    %cst_25 = arith.constant 0.000000e+00 : f32
    %46 = vector.broadcast %cst_25 : f32 to vector<256x64xf32>
    %47 = arith.maximumf %45, %46 : vector<256x64xf32>
    %48 = arith.truncf %47 : vector<256x64xf32> to vector<256x64xbf16>
    %c488 = arith.constant 488 : index
    %c0_26 = arith.constant 0 : index
    %49 = vector.load %arg2[%c488, %c0_26] : memref<592x256xbf16, #tpu.memory_space<vmem>>, vector<64x36xbf16>
    %c6 = arith.constant 6 : index
    %c0_27 = arith.constant 0 : index
    %50 = vector.load %arg3[%c6, %c0_27] : memref<8x256xf32, #tpu.memory_space<vmem>>, vector<1x36xf32>
    %cst_28 = arith.constant dense<0.000000e+00> : vector<256x36xf32>
    %51 = tpu.matmul %48, %49, %cst_28 {dimension_numbers = #tpu.dot_dimension_numbers<[1], [0], [0], [1], [0, 0, 1, 1], [], []>} : vector<256x64xbf16>, vector<64x36xbf16>, vector<256x36xf32> -> vector<256x36xf32>
    %52 = vector.broadcast %50 : vector<1x36xf32> to vector<256x36xf32>
    %53 = arith.addf %51, %52 : vector<256x36xf32>
    %cst_29 = arith.constant 0.000000e+00 : f32
    %54 = vector.broadcast %cst_29 : f32 to vector<256x36xf32>
    %55 = arith.maximumf %53, %54 : vector<256x36xf32>
    %56 = arith.truncf %55 : vector<256x36xf32> to vector<256x36xbf16>
    %57 = vector.extract_strided_slice %56 {offsets = [0, 0], sizes = [128, 36], strides = [1, 1]} : vector<256x36xbf16> to vector<128x36xbf16>
    %c552 = arith.constant 552 : index
    %c0_30 = arith.constant 0 : index
    %58 = vector.load %arg2[%c552, %c0_30] : memref<592x256xbf16, #tpu.memory_space<vmem>>, vector<36x256xbf16>
    %c7 = arith.constant 7 : index
    %c0_31 = arith.constant 0 : index
    %59 = vector.load %arg3[%c7, %c0_31] : memref<8x256xf32, #tpu.memory_space<vmem>>, vector<1x256xf32>
    %cst_32 = arith.constant dense<0.000000e+00> : vector<128x256xf32>
    %60 = tpu.matmul %57, %58, %cst_32 {dimension_numbers = #tpu.dot_dimension_numbers<[1], [0], [0], [1], [0, 0, 1, 1], [], []>} : vector<128x36xbf16>, vector<36x256xbf16>, vector<128x256xf32> -> vector<128x256xf32>
    %61 = vector.broadcast %59 : vector<1x256xf32> to vector<128x256xf32>
    %62 = arith.addf %60, %61 : vector<128x256xf32>
    %c0_33 = arith.constant 0 : index
    %c0_34 = arith.constant 0 : index
    %63 = vector.load %arg4[%c0_33, %c0_34] : memref<256x256xf32, #tpu.memory_space<vmem>>, vector<128x256xf32>
    tpu.vector_store %arg4[%c0_33, %c0_34], %62 {strides = array<i32>} : memref<256x256xf32, #tpu.memory_space<vmem>>, vector<128x256xf32>,
    %64 = vector.extract_strided_slice %56 {offsets = [128, 0], sizes = [128, 36], strides = [1, 1]} : vector<256x36xbf16> to vector<128x36xbf16>
    %c552_35 = arith.constant 552 : index
    %c0_36 = arith.constant 0 : index
    %65 = vector.load %arg2[%c552_35, %c0_36] : memref<592x256xbf16, #tpu.memory_space<vmem>>, vector<36x256xbf16>
    %c7_37 = arith.constant 7 : index
    %c0_38 = arith.constant 0 : index
    %66 = vector.load %arg3[%c7_37, %c0_38] : memref<8x256xf32, #tpu.memory_space<vmem>>, vector<1x256xf32>
    %cst_39 = arith.constant dense<0.000000e+00> : vector<128x256xf32>
    %67 = tpu.matmul %64, %65, %cst_39 {dimension_numbers = #tpu.dot_dimension_numbers<[1], [0], [0], [1], [0, 0, 1, 1], [], []>} : vector<128x36xbf16>, vector<36x256xbf16>, vector<128x256xf32> -> vector<128x256xf32>
    %68 = vector.broadcast %66 : vector<1x256xf32> to vector<128x256xf32>
    %69 = arith.addf %67, %68 : vector<128x256xf32>
    %c128 = arith.constant 128 : index
    %c0_40 = arith.constant 0 : index
    %70 = vector.load %arg4[%c128, %c0_40] : memref<256x256xf32, #tpu.memory_space<vmem>>, vector<128x256xf32>
    tpu.vector_store %arg4[%c128, %c0_40], %69 {strides = array<i32>} : memref<256x256xf32, #tpu.memory_space<vmem>>, vector<128x256xf32>,
    return
  }
  func.func @transform_0(%arg0: i32) -> (i32, i32) {
    %c0_i32 = arith.constant 0 : i32
    %c0_i32_0 = arith.constant 0 : i32
    return %arg0, %c0_i32 : i32, i32
  }
  func.func @transform_1(%arg0: i32) -> (i32, i32) {
    %c0_i32 = arith.constant 0 : i32
    %c0_i32_0 = arith.constant 0 : i32
    %c0_i32_1 = arith.constant 0 : i32
    return %c0_i32, %c0_i32_0 : i32, i32
  }
  func.func @transform_2(%arg0: i32) -> (i32, i32) {
    %c0_i32 = arith.constant 0 : i32
    %c0_i32_0 = arith.constant 0 : i32
    %c0_i32_1 = arith.constant 0 : i32
    return %c0_i32, %c0_i32_0 : i32, i32
  }
  func.func @transform_3(%arg0: i32) -> (i32, i32) {
    %c0_i32 = arith.constant 0 : i32
    %c0_i32_0 = arith.constant 0 : i32
    return %arg0, %c0_i32 : i32, i32
  }
}

</mosaic_0001>

<llo_original>
// kernel: forward.1
$region0: #{forward.1}
  #allocation0 [shape = 'u32[]', space=smem, size = 0x4, offset = 0x4, fixed_abs, tag = 'smem constant byte address 0x4 - core index']
  #allocation1 [shape = 'u32[144,128]{1,0:T(1,128)}', space=vmem, size = 0x12000, scoped, tag = 'internal scratch']
  %s0 = inlined_call_operand.vmem [shape: bf16[256,256], index: 0, kind: input, shape index: {}]
  %s1 = inlined_call_operand.hbm [shape: bf16[592,256], index: 1, kind: input, shape index: {}]
  %s2 = inlined_call_operand.vmem [shape: f32[8,256], index: 2, kind: input, shape index: {}]
  %s3 = inlined_call_operand.vmem [shape: f32[256,256], index: 3, kind: output, shape index: {}]
  %s4 = sld [smem:[#allocation0]]
  $region26: #{forward.1} parent=0
    _
  %s6 = ssub.s32 1, %s4
  %s7 = scalar_select 0, %s6, %s4
  $region1: #{forward.1} parent=0
    #allocation2 [shape = 'u8[303104]{0}', space=vmem, size = 0x4a000, scoped, tag = 'input window, operand 1, single buffered']
    #allocation3 [shape = 's32[1]{0}', space=sflag, size = 0x4, scoped, tag = 'scoped memory for forward.1']
    %8 = vsyncpa [#allocation3], 0
    // Predicated region
    $region2: #{forward.1} parent=1 // pred_check
      _
    $region3: #{forward.1} parent=1 // pred_check_branch
      %10 = sbr.rel (0) target = $region5
    $region4: #{forward.1} parent=1 // pred_region
      _
    $region5: #{forward.1} parent=1 // pred_fallthru
      _
    // Predicated region
    $region6: #{forward.1} parent=1 // pred_check
      _
    $region7: #{forward.1} parent=1 // pred_check_branch
      %12 = sbr.rel (0) target = $region9
    $region8: #{forward.1} parent=1 // pred_region
      %s14 = ssub.s32 9472, 9472
      %15 = vsyncadd [#allocation3], %s14
      %s16 = sshll.u32 [#allocation2], 4
      %s17 = int_to_ptr.vmem [resolvable:$true] %s16
      %22 = dma.hbm_to_vmem [thread:$0]  %s1, 9472, %s17, [#allocation3], 128, 128, 8
    $region9: #{forward.1} parent=1 // pred_fallthru
      _
    // Predicated region
    $region10: #{forward.1} parent=1 // pred_check
      _
    $region11: #{forward.1} parent=1 // pred_check_branch
      %24 = sbr.rel (0) target = $region13
    $region12: #{forward.1} parent=1 // pred_region
      _
    $region13: #{forward.1} parent=1 // pred_fallthru
      _
    // Predicated region
    $region14: #{forward.1} parent=1 // pred_check
      _
    $region15: #{forward.1} parent=1 // pred_check_branch
      %26 = sbr.rel (0) target = $region17
    $region16: #{forward.1} parent=1 // pred_region
      %27 = dma.done [#allocation3], 9472
    $region17: #{forward.1} parent=1 // pred_fallthru
      _
    %v29 = vld [vmem:[%s0] sm:$0xff]
    %v30 = vld [vmem:[%s0 + $0x8] sm:$0xff]
    %v31 = vld [vmem:[%s0 + $0x10] sm:$0xff]
    %v32 = vld [vmem:[%s0 + $0x18] sm:$0xff]
    %v33 = vld [vmem:[%s0 + $0x20] sm:$0xff]
    %v34 = vld [vmem:[%s0 + $0x28] sm:$0xff]
    %v35 = vld [vmem:[%s0 + $0x30] sm:$0xff]
    %v36 = vld [vmem:[%s0 + $0x38] sm:$0xff]
    %v37 = vld [vmem:[%s0 + $0x40] sm:$0xff]
    %v38 = vld [vmem:[%s0 + $0x48] sm:$0xff]
    %v39 = vld [vmem:[%s0 + $0x50] sm:$0xff]
    %v40 = vld [vmem:[%s0 + $0x58] sm:$0xff]
    %v41 = vld [vmem:[%s0 + $0x60] sm:$0xff]
    %v42 = vld [vmem:[%s0 + $0x68] sm:$0xff]
    %v43 = vld [vmem:[%s0 + $0x70] sm:$0xff]
    %v44 = vld [vmem:[%s0 + $0x78] sm:$0xff]
    %v45 = vld [vmem:[%s0 + $0x80] sm:$0xff]
    %v46 = vld [vmem:[%s0 + $0x88] sm:$0xff]
    %v47 = vld [vmem:[%s0 + $0x90] sm:$0xff]
    %v48 = vld [vmem:[%s0 + $0x98] sm:$0xff]
    %v49 = vld [vmem:[%s0 + $0xa0] sm:$0xff]
    %v50 = vld [vmem:[%s0 + $0xa8] sm:$0xff]
    %v51 = vld [vmem:[%s0 + $0xb0] sm:$0xff]
    %v52 = vld [vmem:[%s0 + $0xb8] sm:$0xff]
    %v53 = vld [vmem:[%s0 + $0xc0] sm:$0xff]
    %v54 = vld [vmem:[%s0 + $0xc8] sm:$0xff]
    %v55 = vld [vmem:[%s0 + $0xd0] sm:$0xff]
    %v56 = vld [vmem:[%s0 + $0xd8] sm:$0xff]
    %v57 = vld [vmem:[%s0 + $0xe0] sm:$0xff]
    %v58 = vld [vmem:[%s0 + $0xe8] sm:$0xff]
    %v59 = vld [vmem:[%s0 + $0xf0] sm:$0xff]
    %v60 = vld [vmem:[%s0 + $0xf8] sm:$0xff]
    %v61 = vld [vmem:[#allocation2] sm:$0xf]
    %v62 = vld [vmem:[#allocation2 + $0x8] sm:$0xf]
    %v63 = vld [vmem:[#allocation2 + $0x10] sm:$0xf]
    %v64 = vld [vmem:[#allocation2 + $0x18] sm:$0xf]
    %v65 = vld [vmem:[#allocation2 + $0x20] sm:$0xf]
    %v66 = vld [vmem:[#allocation2 + $0x28] sm:$0xf]
    %v67 = vld [vmem:[#allocation2 + $0x30] sm:$0xf]
    %v68 = vld [vmem:[#allocation2 + $0x38] sm:$0xf]
    %v69 = vld [vmem:[#allocation2 + $0x40] sm:$0xf]
    %v70 = vld [vmem:[#allocation2 + $0x48] sm:$0xf]
    %v71 = vld [vmem:[#allocation2 + $0x50] sm:$0xf]
    %v72 = vld [vmem:[#allocation2 + $0x58] sm:$0xf]
    %v73 = vld [vmem:[#allocation2 + $0x60] sm:$0xf]
    %v74 = vld [vmem:[#allocation2 + $0x68] sm:$0xf]
    %v75 = vld [vmem:[#allocation2 + $0x70] sm:$0xf]
    %v76 = vld [vmem:[#allocation2 + $0x78] sm:$0xf]
    %v77 = vld [vmem:[#allocation2 + $0x80] sm:$0xf]
    %v78 = vld [vmem:[#allocation2 + $0x88] sm:$0xf]
    %v79 = vld [vmem:[#allocation2 + $0x90] sm:$0xf]
    %v80 = vld [vmem:[#allocation2 + $0x98] sm:$0xf]
    %v81 = vld [vmem:[#allocation2 + $0xa0] sm:$0xf]
    %v82 = vld [vmem:[#allocation2 + $0xa8] sm:$0xf]
    %v83 = vld [vmem:[#allocation2 + $0xb0] sm:$0xf]
    %v84 = vld [vmem:[#allocation2 + $0xb8] sm:$0xf]
    %v85 = vld [vmem:[#allocation2 + $0xc0] sm:$0xf]
    %v86 = vld [vmem:[#allocation2 + $0xc8] sm:$0xf]
    %v87 = vld [vmem:[#allocation2 + $0xd0] sm:$0xf]
    %v88 = vld [vmem:[#allocation2 + $0xd8] sm:$0xf]
    %v89 = vld [vmem:[#allocation2 + $0xe0] sm:$0xf]
    %v90 = vld [vmem:[#allocation2 + $0xe8] sm:$0xf]
    %v91 = vld [vmem:[#allocation2 + $0xf0] sm:$0xf]
    %v92 = vld [vmem:[#allocation2 + $0xf8] sm:$0xf]
    %v93 = vld [vmem:[%s2] ss:$0 sm:$0xff]
    %v126 = vunpack.c.l.b16 %v29
    %v127 = vunpack.c.h.b16 %v29
    %v128 = vunpack.c.l.b16 %v30
    %v129 = vunpack.c.h.b16 %v30
    %v130 = vunpack.c.l.b16 %v31
    %v131 = vunpack.c.h.b16 %v31
    %v132 = vunpack.c.l.b16 %v32
    %v133 = vunpack.c.h.b16 %v32
    %v134 = vunpack.c.l.b16 %v33
    %v135 = vunpack.c.h.b16 %v33
    %v136 = vunpack.c.l.b16 %v34
    %v137 = vunpack.c.h.b16 %v34
    %v138 = vunpack.c.l.b16 %v35
    %v139 = vunpack.c.h.b16 %v35
    %v140 = vunpack.c.l.b16 %v36
    %v141 = vunpack.c.h.b16 %v36
    %v142 = vunpack.c.l.b16 %v37
    %v143 = vunpack.c.h.b16 %v37
    %v144 = vunpack.c.l.b16 %v38
    %v145 = vunpack.c.h.b16 %v38
    %v146 = vunpack.c.l.b16 %v39
    %v147 = vunpack.c.h.b16 %v39
    %v148 = vunpack.c.l.b16 %v40
    %v149 = vunpack.c.h.b16 %v40
    %v150 = vunpack.c.l.b16 %v41
    %v151 = vunpack.c.h.b16 %v41
    %v152 = vunpack.c.l.b16 %v42
    %v153 = vunpack.c.h.b16 %v42
    %v154 = vunpack.c.l.b16 %v43
    %v155 = vunpack.c.h.b16 %v43
    %v156 = vunpack.c.l.b16 %v44
    %v157 = vunpack.c.h.b16 %v44
    %v158 = vunpack.c.l.b16 %v45
    %v159 = vunpack.c.h.b16 %v45
    %v160 = vunpack.c.l.b16 %v46
    %v161 = vunpack.c.h.b16 %v46
    %v162 = vunpack.c.l.b16 %v47
    %v163 = vunpack.c.h.b16 %v47
    %v164 = vunpack.c.l.b16 %v48
    %v165 = vunpack.c.h.b16 %v48
    %v166 = vunpack.c.l.b16 %v49
    %v167 = vunpack.c.h.b16 %v49
    %v168 = vunpack.c.l.b16 %v50
    %v169 = vunpack.c.h.b16 %v50
    %v170 = vunpack.c.l.b16 %v51
    %v171 = vunpack.c.h.b16 %v51
    %v172 = vunpack.c.l.b16 %v52
    %v173 = vunpack.c.h.b16 %v52
    %v174 = vunpack.c.l.b16 %v53
    %v175 = vunpack.c.h.b16 %v53
    %v176 = vunpack.c.l.b16 %v54
    %v177 = vunpack.c.h.b16 %v54
    %v178 = vunpack.c.l.b16 %v55
    %v179 = vunpack.c.h.b16 %v55
    %v180 = vunpack.c.l.b16 %v56
    %v181 = vunpack.c.h.b16 %v56
    %v182 = vunpack.c.l.b16 %v57
    %v183 = vunpack.c.h.b16 %v57
    %v184 = vunpack.c.l.b16 %v58
    %v185 = vunpack.c.h.b16 %v58
    %v186 = vunpack.c.l.b16 %v59
    %v187 = vunpack.c.h.b16 %v59
    %v188 = vunpack.c.l.b16 %v60
    %v189 = vunpack.c.h.b16 %v60
    %v190 = vpack.c.b16 %v128, %v126
    %v191 = vpack.c.b16 %v129, %v127
    %v192 = vpack.c.b16 %v132, %v130
    %v193 = vpack.c.b16 %v133, %v131
    %v194 = vpack.c.b16 %v136, %v134
    %v195 = vpack.c.b16 %v137, %v135
    %v196 = vpack.c.b16 %v140, %v138
    %v197 = vpack.c.b16 %v141, %v139
    %v198 = vpack.c.b16 %v144, %v142
    %v199 = vpack.c.b16 %v145, %v143
    %v200 = vpack.c.b16 %v148, %v146
    %v201 = vpack.c.b16 %v149, %v147
    %v202 = vpack.c.b16 %v152, %v150
    %v203 = vpack.c.b16 %v153, %v151
    %v204 = vpack.c.b16 %v156, %v154
    %v205 = vpack.c.b16 %v157, %v155
    %v206 = vpack.c.b16 %v160, %v158
    %v207 = vpack.c.b16 %v161, %v159
    %v208 = vpack.c.b16 %v164, %v162
    %v209 = vpack.c.b16 %v165, %v163
    %v210 = vpack.c.b16 %v168, %v166
    %v211 = vpack.c.b16 %v169, %v167
    %v212 = vpack.c.b16 %v172, %v170
    %v213 = vpack.c.b16 %v173, %v171
    %v214 = vpack.c.b16 %v176, %v174
    %v215 = vpack.c.b16 %v177, %v175
    %v216 = vpack.c.b16 %v180, %v178
    %v217 = vpack.c.b16 %v181, %v179
    %v218 = vpack.c.b16 %v184, %v182
    %v219 = vpack.c.b16 %v185, %v183
    %v220 = vpack.c.b16 %v188, %v186
    %v221 = vpack.c.b16 %v189, %v187
    %v286 = vunpack.c.l.b16 %v61
    %v287 = vunpack.c.l.b16 %v62
    %v288 = vunpack.c.l.b16 %v63
    %v289 = vunpack.c.l.b16 %v64
    %v290 = vunpack.c.l.b16 %v65
    %v291 = vunpack.c.l.b16 %v66
    %v292 = vunpack.c.l.b16 %v67
    %v293 = vunpack.c.l.b16 %v68
    %v294 = vunpack.c.l.b16 %v69
    %v295 = vunpack.c.l.b16 %v70
    %v296 = vunpack.c.l.b16 %v71
    %v297 = vunpack.c.l.b16 %v72
    %v298 = vunpack.c.l.b16 %v73
    %v299 = vunpack.c.l.b16 %v74
    %v300 = vunpack.c.l.b16 %v75
    %v301 = vunpack.c.l.b16 %v76
    %v302 = vunpack.c.l.b16 %v77
    %v303 = vunpack.c.l.b16 %v78
    %v304 = vunpack.c.l.b16 %v79
    %v305 = vunpack.c.l.b16 %v80
    %v306 = vunpack.c.l.b16 %v81
    %v307 = vunpack.c.l.b16 %v82
    %v308 = vunpack.c.l.b16 %v83
    %v309 = vunpack.c.l.b16 %v84
    %v310 = vunpack.c.l.b16 %v85
    %v311 = vunpack.c.l.b16 %v86
    %v312 = vunpack.c.l.b16 %v87
    %v313 = vunpack.c.l.b16 %v88
    %v314 = vunpack.c.l.b16 %v89
    %v315 = vunpack.c.l.b16 %v90
    %v316 = vunpack.c.l.b16 %v91
    %v317 = vunpack.c.l.b16 %v92
    %v318 = vpack.c.b16 %v287, %v286
    %v319 = vpack.c.b16 %v289, %v288
    %v320 = vpack.c.b16 %v291, %v290
    %v321 = vpack.c.b16 %v293, %v292
    %v322 = vpack.c.b16 %v295, %v294
    %v323 = vpack.c.b16 %v297, %v296
    %v324 = vpack.c.b16 %v299, %v298
    %v325 = vpack.c.b16 %v301, %v300
    %v326 = vpack.c.b16 %v303, %v302
    %v327 = vpack.c.b16 %v305, %v304
    %v328 = vpack.c.b16 %v307, %v306
    %v329 = vpack.c.b16 %v309, %v308
    %v330 = vpack.c.b16 %v311, %v310
    %v331 = vpack.c.b16 %v313, %v312
    %v332 = vpack.c.b16 %v315, %v314
    %v333 = vpack.c.b16 %v317, %v316
    %350 = vmatprep.subr.bf16.mxu0 0
    %351 = vmatpush1.bf16.msra.mxu0 %v318
    %352 = vmatprep.subr.bf16.mxu0 0
    %353 = vmatpush1.bf16.msra.mxu0 %v319
    %354 = vmatprep.subr.bf16.mxu0 0
    %355 = vmatpush1.bf16.msra.mxu0 %v320
    %356 = vmatprep.subr.bf16.mxu0 0
    %357 = vmatpush1.bf16.msra.mxu0 %v321
    %358 = vmatprep.subr.bf16.mxu0 0
    %359 = vmatpush1.bf16.msra.mxu0 %v322
    %360 = vmatprep.subr.bf16.mxu0 0
    %361 = vmatpush1.bf16.msra.mxu0 %v323
    %362 = vmatprep.subr.bf16.mxu0 0
    %363 = vmatpush1.bf16.msra.mxu0 %v324
    %364 = vmatprep.subr.bf16.mxu0 0
    %365 = vmatpush1.bf16.msra.mxu0 %v325
    %366 = vmatprep.subr.bf16.mxu0 0
    %367 = vmatpush1.bf16.msra.mxu0 %v326
    %368 = vmatprep.subr.bf16.mxu0 0
    %369 = vmatpush1.bf16.msra.mxu0 %v327
    %370 = vmatprep.subr.bf16.mxu0 0
    %371 = vmatpush1.bf16.msra.mxu0 %v328
    %372 = vmatprep.subr.bf16.mxu0 0
    %373 = vmatpush1.bf16.msra.mxu0 %v329
    %374 = vmatprep.subr.bf16.mxu0 0
    %375 = vmatpush1.bf16.msra.mxu0 %v330
    %376 = vmatprep.subr.bf16.mxu0 0
    %377 = vmatpush1.bf16.msra.mxu0 %v331
    %378 = vmatprep.subr.bf16.mxu0 0
    %379 = vmatpush1.bf16.msra.mxu0 %v332
    %380 = vmatprep.subr.bf16.mxu0 0
    %381 = vmatpush1.bf16.msra.mxu0 %v333
    %382 = vmatprep.mubr.bf16.mxu0 %v191
    %383 = vmatmul.mubr.bf16.gmra.mrb[0].mxu0 %v190
    %v384 = vpop.f32.mrb[0].mxu0
    %v385 = vadd.f32 %v93, %v384
    %v386 = vpop.f32.mrb[0].mxu0
    %v387 = vpop.f32.mrb[0].mxu0
    %v388 = vadd.f32 %v93, %v387
    %v389 = vpop.f32.mrb[0].mxu0
    %390 = vmatprep.mubr.bf16.mxu0 %v193
    %391 = vmatmul.mubr.bf16.gmra.mrb[0].mxu0 %v192
    %v392 = vpop.f32.mrb[0].mxu0
    %v393 = vadd.f32 %v93, %v392
    %v394 = vpop.f32.mrb[0].mxu0
    %v395 = vpop.f32.mrb[0].mxu0
    %v396 = vadd.f32 %v93, %v395
    %v397 = vpop.f32.mrb[0].mxu0
    %398 = vmatprep.mubr.bf16.mxu0 %v195
    %399 = vmatmul.mubr.bf16.gmra.mrb[0].mxu0 %v194
    %v400 = vpop.f32.mrb[0].mxu0
    %v401 = vadd.f32 %v93, %v400
    %v402 = vpop.f32.mrb[0].mxu0
    %v403 = vpop.f32.mrb[0].mxu0
    %v404 = vadd.f32 %v93, %v403
    %v405 = vpop.f32.mrb[0].mxu0
    %406 = vmatprep.mubr.bf16.mxu0 %v197
    %407 = vmatmul.mubr.bf16.gmra.mrb[0].mxu0 %v196
    %v408 = vpop.f32.mrb[0].mxu0
    %v409 = vadd.f32 %v93, %v408
    %v410 = vpop.f32.mrb[0].mxu0
    %v411 = vpop.f32.mrb[0].mxu0
    %v412 = vadd.f32 %v93, %v411
    %v413 = vpop.f32.mrb[0].mxu0
    %414 = vmatprep.mubr.bf16.mxu0 %v199
    %415 = vmatmul.mubr.bf16.gmra.mrb[0].mxu0 %v198
    %v416 = vpop.f32.mrb[0].mxu0
    %v417 = vadd.f32 %v93, %v416
    %v418 = vpop.f32.mrb[0].mxu0
    %v419 = vpop.f32.mrb[0].mxu0
    %v420 = vadd.f32 %v93, %v419
    %v421 = vpop.f32.mrb[0].mxu0
    %422 = vmatprep.mubr.bf16.mxu0 %v201
    %423 = vmatmul.mubr.bf16.gmra.mrb[0].mxu0 %v200
    %v424 = vpop.f32.mrb[0].mxu0
    %v425 = vadd.f32 %v93, %v424
    %v426 = vpop.f32.mrb[0].mxu0
    %v427 = vpop.f32.mrb[0].mxu0
    %v428 = vadd.f32 %v93, %v427
    %v429 = vpop.f32.mrb[0].mxu0
    %430 = vmatprep.mubr.bf16.mxu0 %v203
    %431 = vmatmul.mubr.bf16.gmra.mrb[0].mxu0 %v202
    %v432 = vpop.f32.mrb[0].mxu0
    %v433 = vadd.f32 %v93, %v432
    %v434 = vpop.f32.mrb[0].mxu0
    %v435 = vpop.f32.mrb[0].mxu0
    %v436 = vadd.f32 %v93, %v435
    %v437 = vpop.f32.mrb[0].mxu0
    %438 = vmatprep.mubr.bf16.mxu0 %v205
    %439 = vmatmul.mubr.bf16.gmra.mrb[0].mxu0 %v204
    %v440 = vpop.f32.mrb[0].mxu0
    %v441 = vadd.f32 %v93, %v440
    %v442 = vpop.f32.mrb[0].mxu0
    %v443 = vpop.f32.mrb[0].mxu0
    %v444 = vadd.f32 %v93, %v443
    %v445 = vpop.f32.mrb[0].mxu0
    %446 = vmatprep.mubr.bf16.mxu0 %v207
    %447 = vmatmul.mubr.bf16.gmra.mrb[0].mxu0 %v206
    %v448 = vpop.f32.mrb[0].mxu0
    %v449 = vadd.f32 %v93, %v448
    %v450 = vpop.f32.mrb[0].mxu0
    %v451 = vpop.f32.mrb[0].mxu0
    %v452 = vadd.f32 %v93, %v451
    %v453 = vpop.f32.mrb[0].mxu0
    %454 = vmatprep.mubr.bf16.mxu0 %v209
    %455 = vmatmul.mubr.bf16.gmra.mrb[0].mxu0 %v208
    %v456 = vpop.f32.mrb[0].mxu0
    %v457 = vadd.f32 %v93, %v456
    %v458 = vpop.f32.mrb[0].mxu0
    %v459 = vpop.f32.mrb[0].mxu0
    %v460 = vadd.f32 %v93, %v459
    %v461 = vpop.f32.mrb[0].mxu0
    %462 = vmatprep.mubr.bf16.mxu0 %v211
    %463 = vmatmul.mubr.bf16.gmra.mrb[0].mxu0 %v210
    %v464 = vpop.f32.mrb[0].mxu0
    %v465 = vadd.f32 %v93, %v464
    %v466 = vpop.f32.mrb[0].mxu0
    %v467 = vpop.f32.mrb[0].mxu0
    %v468 = vadd.f32 %v93, %v467
    %v469 = vpop.f32.mrb[0].mxu0
    %470 = vmatprep.mubr.bf16.mxu0 %v213
    %471 = vmatmul.mubr.bf16.gmra.mrb[0].mxu0 %v212
    %v472 = vpop.f32.mrb[0].mxu0
    %v473 = vadd.f32 %v93, %v472
    %v474 = vpop.f32.mrb[0].mxu0
    %v475 = vpop.f32.mrb[0].mxu0
    %v476 = vadd.f32 %v93, %v475
    %v477 = vpop.f32.mrb[0].mxu0
    %478 = vmatprep.mubr.bf16.mxu0 %v215
    %479 = vmatmul.mubr.bf16.gmra.mrb[0].mxu0 %v214
    %v480 = vpop.f32.mrb[0].mxu0
    %v481 = vadd.f32 %v93, %v480
    %v482 = vpop.f32.mrb[0].mxu0
    %v483 = vpop.f32.mrb[0].mxu0
    %v484 = vadd.f32 %v93, %v483
    %v485 = vpop.f32.mrb[0].mxu0
    %486 = vmatprep.mubr.bf16.mxu0 %v217
    %487 = vmatmul.mubr.bf16.gmra.mrb[0].mxu0 %v216
    %v488 = vpop.f32.mrb[0].mxu0
    %v489 = vadd.f32 %v93, %v488
    %v490 = vpop.f32.mrb[0].mxu0
    %v491 = vpop.f32.mrb[0].mxu0
    %v492 = vadd.f32 %v93, %v491
    %v493 = vpop.f32.mrb[0].mxu0
    %494 = vmatprep.mubr.bf16.mxu0 %v219
    %495 = vmatmul.mubr.bf16.gmra.mrb[0].mxu0 %v218
    %v496 = vpop.f32.mrb[0].mxu0
    %v497 = vadd.f32 %v93, %v496
    %v498 = vpop.f32.mrb[0].mxu0
    %v499 = vpop.f32.mrb[0].mxu0
    %v500 = vadd.f32 %v93, %v499
    %v501 = vpop.f32.mrb[0].mxu0
    %502 = vmatprep.mubr.bf16.mxu0 %v221
    %503 = vmatmul.mubr.bf16.gmra.mrb[0].mxu0 %v220
    %v504 = vpop.f32.mrb[0].mxu0
    %v505 = vadd.f32 %v93, %v504
    %v506 = vpop.f32.mrb[0].mxu0
    %v507 = vpop.f32.mrb[0].mxu0
    %v508 = vadd.f32 %v93, %v507
    %v509 = vpop.f32.mrb[0].mxu0
    %510 = vdwg.mxu0
    %v511 = vmax.f32 %v385, 0.0
    %v512 = vmax.f32 %v388, 0.0
    %v513 = vmax.f32 %v393, 0.0
    %v514 = vmax.f32 %v396, 0.0
    %v515 = vmax.f32 %v401, 0.0
    %v516 = vmax.f32 %v404, 0.0
    %v517 = vmax.f32 %v409, 0.0
    %v518 = vmax.f32 %v412, 0.0
    %v519 = vmax.f32 %v417, 0.0
    %v520 = vmax.f32 %v420, 0.0
    %v521 = vmax.f32 %v425, 0.0
    %v522 = vmax.f32 %v428, 0.0
    %v523 = vmax.f32 %v433, 0.0
    %v524 = vmax.f32 %v436, 0.0
    %v525 = vmax.f32 %v441, 0.0
    %v526 = vmax.f32 %v444, 0.0
    %v527 = vmax.f32 %v449, 0.0
    %v528 = vmax.f32 %v452, 0.0
    %v529 = vmax.f32 %v457, 0.0
    %v530 = vmax.f32 %v460, 0.0
    %v531 = vmax.f32 %v465, 0.0
    %v532 = vmax.f32 %v468, 0.0
    %v533 = vmax.f32 %v473, 0.0
    %v534 = vmax.f32 %v476, 0.0
    %v535 = vmax.f32 %v481, 0.0
    %v536 = vmax.f32 %v484, 0.0
    %v537 = vmax.f32 %v489, 0.0
    %v538 = vmax.f32 %v492, 0.0
    %v539 = vmax.f32 %v497, 0.0
    %v540 = vmax.f32 %v500, 0.0
    %v541 = vmax.f32 %v505, 0.0
    %v542 = vmax.f32 %v508, 0.0
    %v543 = vpack.c.bf16 %v512, %v511
    %v544 = vpack.c.bf16 %v514, %v513
    %v545 = vpack.c.bf16 %v516, %v515
    %v546 = vpack.c.bf16 %v518, %v517
    %v547 = vpack.c.bf16 %v520, %v519
    %v548 = vpack.c.bf16 %v522, %v521
    %v549 = vpack.c.bf16 %v524, %v523
    %v550 = vpack.c.bf16 %v526, %v525
    %v551 = vpack.c.bf16 %v528, %v527
    %v552 = vpack.c.bf16 %v530, %v529
    %v553 = vpack.c.bf16 %v532, %v531
    %v554 = vpack.c.bf16 %v534, %v533
    %v555 = vpack.c.bf16 %v536, %v535
    %v556 = vpack.c.bf16 %v538, %v537
    %v557 = vpack.c.bf16 %v540, %v539
    %v558 = vpack.c.bf16 %v542, %v541
    %v559 = vld [vmem:[#allocation2 + $0x100] sm:$0xf]
    %v560 = vld [vmem:[#allocation2 + $0x108] sm:$0xf]
    %v561 = vld [vmem:[#allocation2 + $0x110] sm:$0xf]
    %v562 = vld [vmem:[#allocation2 + $0x118] sm:$0xf]
    %v563 = vld [vmem:[#allocation2 + $0x120] sm:$0x3]
    %v564 = vld [vmem:[%s2 + $0x1] ss:$0 sm:$0xff]
    %v570 = vunpack.c.l.b16 %v559
    %v571 = vunpack.c.l.b16 %v560
    %v572 = vunpack.c.l.b16 %v561
    %v573 = vunpack.c.l.b16 %v562
    %v574 = vunpack.c.l.b16 %v563
    %v575 = vpack.c.b16 %v571, %v570
    %v576 = vpack.c.b16 %v573, %v572
    %v577 = vpack.c.b16 %v574, %v574
    %vm580 = vcmask 293888
    %v582 = vsel %vm580, %v543, 0
    %v585 = vsel %vm580, %v544, 0
    %v588 = vsel %vm580, %v545, 0
    %v591 = vsel %vm580, %v546, 0
    %v594 = vsel %vm580, %v547, 0
    %v597 = vsel %vm580, %v548, 0
    %v600 = vsel %vm580, %v549, 0
    %v603 = vsel %vm580, %v550, 0
    %v606 = vsel %vm580, %v551, 0
    %v609 = vsel %vm580, %v552, 0
    %v612 = vsel %vm580, %v553, 0
    %v615 = vsel %vm580, %v554, 0
    %v618 = vsel %vm580, %v555, 0
    %v621 = vsel %vm580, %v556, 0
    %v624 = vsel %vm580, %v557, 0
    %v627 = vsel %vm580, %v558, 0
    %vm629 = vcmask 1041408
    %v631 = vsel %vm629, %v577, 0
    %633 = vmatprep.subr.bf16.mxu0 0
    %634 = vmatpush1.bf16.msra.mxu0 %v575
    %635 = vmatprep.subr.bf16.mxu0 0
    %636 = vmatpush1.bf16.msra.mxu0 %v576
    %637 = vmatprep.subr.bf16.mxu0 0
    %638 = vmatpush1.bf16.msra.mxu0 %v631
    %639 = vmatprep.subr.bf16.mxu0 0
    %640 = vmatpush1.bf16.msra.mxu0 0
    %641 = vmatprep.subr.bf16.mxu0 0
    %642 = vmatpush1.bf16.msra.mxu0 0
    %643 = vmatprep.subr.bf16.mxu0 0
    %644 = vmatpush1.bf16.msra.mxu0 0
    %645 = vmatprep.subr.bf16.mxu0 0
    %646 = vmatpush1.bf16.msra.mxu0 0
    %647 = vmatprep.subr.bf16.mxu0 0
    %648 = vmatpush1.bf16.msra.mxu0 0
    %649 = vmatprep.subr.bf16.mxu0 0
    %650 = vmatpush1.bf16.msra.mxu0 0
    %651 = vmatprep.subr.bf16.mxu0 0
    %652 = vmatpush1.bf16.msra.mxu0 0
    %653 = vmatprep.subr.bf16.mxu0 0
    %654 = vmatpush1.bf16.msra.mxu0 0
    %655 = vmatprep.subr.bf16.mxu0 0
    %656 = vmatpush1.bf16.msra.mxu0 0
    %657 = vmatprep.subr.bf16.mxu0 0
    %658 = vmatpush1.bf16.msra.mxu0 0
    %659 = vmatprep.subr.bf16.mxu0 0
    %660 = vmatpush1.bf16.msra.mxu0 0
    %661 = vmatprep.subr.bf16.mxu0 0
    %662 = vmatpush1.bf16.msra.mxu0 0
    %663 = vmatprep.subr.bf16.mxu0 0
    %664 = vmatpush1.bf16.msra.mxu0 0
    %665 = vmatprep.mubr.bf16.mxu0 0
    %666 = vmatmul.mubr.bf16.gmra.mrb[0].mxu0 %v582
    %v667 = vpop.f32.mrb[0].mxu0
    %v668 = vadd.f32 %v564, %v667
    %v669 = vpop.f32.mrb[0].mxu0
    %v670 = vpop.f32.mrb[0].mxu0
    %v671 = vadd.f32 %v564, %v670
    %v672 = vpop.f32.mrb[0].mxu0
    %673 = vmatprep.mubr.bf16.mxu0 0
    %674 = vmatmul.mubr.bf16.gmra.mrb[0].mxu0 %v585
    %v675 = vpop.f32.mrb[0].mxu0
    %v676 = vadd.f32 %v564, %v675
    %v677 = vpop.f32.mrb[0].mxu0
    %v678 = vpop.f32.mrb[0].mxu0
    %v679 = vadd.f32 %v564, %v678
    %v680 = vpop.f32.mrb[0].mxu0
    %681 = vmatprep.mubr.bf16.mxu0 0
    %682 = vmatmul.mubr.bf16.gmra.mrb[0].mxu0 %v588
    %v683 = vpop.f32.mrb[0].mxu0
    %v684 = vadd.f32 %v564, %v683
    %v685 = vpop.f32.mrb[0].mxu0
    %v686 = vpop.f32.mrb[0].mxu0
    %v687 = vadd.f32 %v564, %v686
    %v688 = vpop.f32.mrb[0].mxu0
    %689 = vmatprep.mubr.bf16.mxu0 0
    %690 = vmatmul.mubr.bf16.gmra.mrb[0].mxu0 %v591
    %v691 = vpop.f32.mrb[0].mxu0
    %v692 = vadd.f32 %v564, %v691
    %v693 = vpop.f32.mrb[0].mxu0
    %v694 = vpop.f32.mrb[0].mxu0
    %v695 = vadd.f32 %v564, %v694
    %v696 = vpop.f32.mrb[0].mxu0
    %697 = vmatprep.mubr.bf16.mxu0 0
    %698 = vmatmul.mubr.bf16.gmra.mrb[0].mxu0 %v594
    %v699 = vpop.f32.mrb[0].mxu0
    %v700 = vadd.f32 %v564, %v699
    %v701 = vpop.f32.mrb[0].mxu0
    %v702 = vpop.f32.mrb[0].mxu0
    %v703 = vadd.f32 %v564, %v702
    %v704 = vpop.f32.mrb[0].mxu0
    %705 = vmatprep.mubr.bf16.mxu0 0
    %706 = vmatmul.mubr.bf16.gmra.mrb[0].mxu0 %v597
    %v707 = vpop.f32.mrb[0].mxu0
    %v708 = vadd.f32 %v564, %v707
    %v709 = vpop.f32.mrb[0].mxu0
    %v710 = vpop.f32.mrb[0].mxu0
    %v711 = vadd.f32 %v564, %v710
    %v712 = vpop.f32.mrb[0].mxu0
    %713 = vmatprep.mubr.bf16.mxu0 0
    %714 = vmatmul.mubr.bf16.gmra.mrb[0].mxu0 %v600
    %v715 = vpop.f32.mrb[0].mxu0
    %v716 = vadd.f32 %v564, %v715
    %v717 = vpop.f32.mrb[0].mxu0
    %v718 = vpop.f32.mrb[0].mxu0
    %v719 = vadd.f32 %v564, %v718
    %v720 = vpop.f32.mrb[0].mxu0
    %721 = vmatprep.mubr.bf16.mxu0 0
    %722 = vmatmul.mubr.bf16.gmra.mrb[0].mxu0 %v603
    %v723 = vpop.f32.mrb[0].mxu0
    %v724 = vadd.f32 %v564, %v723
    %v725 = vpop.f32.mrb[0].mxu0
    %v726 = vpop.f32.mrb[0].mxu0
    %v727 = vadd.f32 %v564, %v726
    %v728 = vpop.f32.mrb[0].mxu0
    %729 = vmatprep.mubr.bf16.mxu0 0
    %730 = vmatmul.mubr.bf16.gmra.mrb[0].mxu0 %v606
    %v731 = vpop.f32.mrb[0].mxu0
    %v732 = vadd.f32 %v564, %v731
    %v733 = vpop.f32.mrb[0].mxu0
    %v734 = vpop.f32.mrb[0].mxu0
    %v735 = vadd.f32 %v564, %v734
    %v736 = vpop.f32.mrb[0].mxu0
    %737 = vmatprep.mubr.bf16.mxu0 0
    %738 = vmatmul.mubr.bf16.gmra.mrb[0].mxu0 %v609
    %v739 = vpop.f32.mrb[0].mxu0
    %v740 = vadd.f32 %v564, %v739
    %v741 = vpop.f32.mrb[0].mxu0
    %v742 = vpop.f32.mrb[0].mxu0
    %v743 = vadd.f32 %v564, %v742
    %v744 = vpop.f32.mrb[0].mxu0
    %745 = vmatprep.mubr.bf16.mxu0 0
    %746 = vmatmul.mubr.bf16.gmra.mrb[0].mxu0 %v612
    %v747 = vpop.f32.mrb[0].mxu0
    %v748 = vadd.f32 %v564, %v747
    %v749 = vpop.f32.mrb[0].mxu0
    %v750 = vpop.f32.mrb[0].mxu0
    %v751 = vadd.f32 %v564, %v750
    %v752 = vpop.f32.mrb[0].mxu0
    %753 = vmatprep.mubr.bf16.mxu0 0
    %754 = vmatmul.mubr.bf16.gmra.mrb[0].mxu0 %v615
    %v755 = vpop.f32.mrb[0].mxu0
    %v756 = vadd.f32 %v564, %v755
    %v757 = vpop.f32.mrb[0].mxu0
    %v758 = vpop.f32.mrb[0].mxu0
    %v759 = vadd.f32 %v564, %v758
    %v760 = vpop.f32.mrb[0].mxu0
    %761 = vmatprep.mubr.bf16.mxu0 0
    %762 = vmatmul.mubr.bf16.gmra.mrb[0].mxu0 %v618
    %v763 = vpop.f32.mrb[0].mxu0
    %v764 = vadd.f32 %v564, %v763
    %v765 = vpop.f32.mrb[0].mxu0
    %v766 = vpop.f32.mrb[0].mxu0
    %v767 = vadd.f32 %v564, %v766
    %v768 = vpop.f32.mrb[0].mxu0
    %769 = vmatprep.mubr.bf16.mxu0 0
    %770 = vmatmul.mubr.bf16.gmra.mrb[0].mxu0 %v621
    %v771 = vpop.f32.mrb[0].mxu0
    %v772 = vadd.f32 %v564, %v771
    %v773 = vpop.f32.mrb[0].mxu0
    %v774 = vpop.f32.mrb[0].mxu0
    %v775 = vadd.f32 %v564, %v774
    %v776 = vpop.f32.mrb[0].mxu0
    %777 = vmatprep.mubr.bf16.mxu0 0
    %778 = vmatmul.mubr.bf16.gmra.mrb[0].mxu0 %v624
    %v779 = vpop.f32.mrb[0].mxu0
    %v780 = vadd.f32 %v564, %v779
    %v781 = vpop.f32.mrb[0].mxu0
    %v782 = vpop.f32.mrb[0].mxu0
    %v783 = vadd.f32 %v564, %v782
    %v784 = vpop.f32.mrb[0].mxu0
    %785 = vmatprep.mubr.bf16.mxu0 0
    %786 = vmatmul.mubr.bf16.gmra.mrb[0].mxu0 %v627
    %v787 = vpop.f32.mrb[0].mxu0
    %v788 = vadd.f32 %v564, %v787
    %v789 = vpop.f32.mrb[0].mxu0
    %v790 = vpop.f32.mrb[0].mxu0
    %v791 = vadd.f32 %v564, %v790
    %v792 = vpop.f32.mrb[0].mxu0
    %793 = vdwg.mxu0
    %v794 = vmax.f32 %v668, 0.0
    %v795 = vmax.f32 %v671, 0.0
    %v796 = vmax.f32 %v676, 0.0
    %v797 = vmax.f32 %v679, 0.0
    %v798 = vmax.f32 %v684, 0.0
    %v799 = vmax.f32 %v687, 0.0
    %v800 = vmax.f32 %v692, 0.0
    %v801 = vmax.f32 %v695, 0.0
    %v802 = vmax.f32 %v700, 0.0
    %v803 = vmax.f32 %v703, 0.0
    %v804 = vmax.f32 %v708, 0.0
    %v805 = vmax.f32 %v711, 0.0
    %v806 = vmax.f32 %v716, 0.0
    %v807 = vmax.f32 %v719, 0.0
    %v808 = vmax.f32 %v724, 0.0
    %v809 = vmax.f32 %v727, 0.0
    %v810 = vmax.f32 %v732, 0.0
    %v811 = vmax.f32 %v735, 0.0
    %v812 = vmax.f32 %v740, 0.0
    %v813 = vmax.f32 %v743, 0.0
    %v814 = vmax.f32 %v748, 0.0
    %v815 = vmax.f32 %v751, 0.0
    %v816 = vmax.f32 %v756, 0.0
    %v817 = vmax.f32 %v759, 0.0
    %v818 = vmax.f32 %v764, 0.0
    %v819 = vmax.f32 %v767, 0.0
    %v820 = vmax.f32 %v772, 0.0
    %v821 = vmax.f32 %v775, 0.0
    %v822 = vmax.f32 %v780, 0.0
    %v823 = vmax.f32 %v783, 0.0
    %v824 = vmax.f32 %v788, 0.0
    %v825 = vmax.f32 %v791, 0.0
    %v826 = vpack.c.bf16 %v795, %v794
    %v827 = vpack.c.bf16 %v797, %v796
    %v828 = vpack.c.bf16 %v799, %v798
    %v829 = vpack.c.bf16 %v801, %v800
    %v830 = vpack.c.bf16 %v803, %v802
    %v831 = vpack.c.bf16 %v805, %v804
    %v832 = vpack.c.bf16 %v807, %v806
    %v833 = vpack.c.bf16 %v809, %v808
    %v834 = vpack.c.bf16 %v811, %v810
    %v835 = vpack.c.bf16 %v813, %v812
    %v836 = vpack.c.bf16 %v815, %v814
    %v837 = vpack.c.bf16 %v817, %v816
    %v838 = vpack.c.bf16 %v819, %v818
    %v839 = vpack.c.bf16 %v821, %v820
    %v840 = vpack.c.bf16 %v823, %v822
    %v841 = vpack.c.bf16 %v825, %v824
    %v842 = vld [vmem:[#allocation2 + $0x128] sm:$0xf]
    %v843 = vld [vmem:[#allocation2 + $0x130] sm:$0xf]
    %v844 = vld [vmem:[#allocation2 + $0x138] sm:$0xf]
    %v845 = vld [vmem:[#allocation2 + $0x140] sm:$0xf]
    %v846 = vld [vmem:[#allocation2 + $0x148] sm:$0xf]
    %v847 = vld [vmem:[#allocation2 + $0x150] sm:$0xf]
    %v848 = vld [vmem:[#allocation2 + $0x158] sm:$0xf]
    %v849 = vld [vmem:[#allocation2 + $0x160] sm:$0xf]
    %v850 = vld [vmem:[%s2 + $0x2] ss:$0 sm:$0xff]
    %v859 = vunpack.c.l.b16 %v842
    %v860 = vunpack.c.l.b16 %v843
    %v861 = vunpack.c.l.b16 %v844
    %v862 = vunpack.c.l.b16 %v845
    %v863 = vunpack.c.l.b16 %v846
    %v864 = vunpack.c.l.b16 %v847
    %v865 = vunpack.c.l.b16 %v848
    %v866 = vunpack.c.l.b16 %v849
    %v867 = vpack.c.b16 %v860, %v859
    %v868 = vpack.c.b16 %v862, %v861
    %v869 = vpack.c.b16 %v864, %v863
    %v870 = vpack.c.b16 %v866, %v865
    %vm875 = vcmask 523264
    %v877 = vsel %vm875, %v826, 0
    %v880 = vsel %vm875, %v827, 0
    %v883 = vsel %vm875, %v828, 0
    %v886 = vsel %vm875, %v829, 0
    %v889 = vsel %vm875, %v830, 0
    %v892 = vsel %vm875, %v831, 0
    %v895 = vsel %vm875, %v832, 0
    %v898 = vsel %vm875, %v833, 0
    %v901 = vsel %vm875, %v834, 0
    %v904 = vsel %vm875, %v835, 0
    %v907 = vsel %vm875, %v836, 0
    %v910 = vsel %vm875, %v837, 0
    %v913 = vsel %vm875, %v838, 0
    %v916 = vsel %vm875, %v839, 0
    %v919 = vsel %vm875, %v840, 0
    %v922 = vsel %vm875, %v841, 0
    %924 = vmatprep.subr.bf16.mxu0 0
    %925 = vmatpush1.bf16.msra.mxu0 %v867
    %926 = vmatprep.subr.bf16.mxu0 0
    %927 = vmatpush1.bf16.msra.mxu0 %v868
    %928 = vmatprep.subr.bf16.mxu0 0
    %929 = vmatpush1.bf16.msra.mxu0 %v869
    %930 = vmatprep.subr.bf16.mxu0 0
    %931 = vmatpush1.bf16.msra.mxu0 %v870
    %932 = vmatprep.subr.bf16.mxu0 0
    %933 = vmatpush1.bf16.msra.mxu0 0
    %934 = vmatprep.subr.bf16.mxu0 0
    %935 = vmatpush1.bf16.msra.mxu0 0
    %936 = vmatprep.subr.bf16.mxu0 0
    %937 = vmatpush1.bf16.msra.mxu0 0
    %938 = vmatprep.subr.bf16.mxu0 0
    %939 = vmatpush1.bf16.msra.mxu0 0
    %940 = vmatprep.subr.bf16.mxu0 0
    %941 = vmatpush1.bf16.msra.mxu0 0
    %942 = vmatprep.subr.bf16.mxu0 0
    %943 = vmatpush1.bf16.msra.mxu0 0
    %944 = vmatprep.subr.bf16.mxu0 0
    %945 = vmatpush1.bf16.msra.mxu0 0
    %946 = vmatprep.subr.bf16.mxu0 0
    %947 = vmatpush1.bf16.msra.mxu0 0
    %948 = vmatprep.subr.bf16.mxu0 0
    %949 = vmatpush1.bf16.msra.mxu0 0
    %950 = vmatprep.subr.bf16.mxu0 0
    %951 = vmatpush1.bf16.msra.mxu0 0
    %952 = vmatprep.subr.bf16.mxu0 0
    %953 = vmatpush1.bf16.msra.mxu0 0
    %954 = vmatprep.subr.bf16.mxu0 0
    %955 = vmatpush1.bf16.msra.mxu0 0
    %956 = vmatprep.mubr.bf16.mxu0 0
    %957 = vmatmul.mubr.bf16.gmra.mrb[0].mxu0 %v877
    %v958 = vpop.f32.mrb[0].mxu0
    %v959 = vadd.f32 %v850, %v958
    %v960 = vpop.f32.mrb[0].mxu0
    %v961 = vpop.f32.mrb[0].mxu0
    %v962 = vadd.f32 %v850, %v961
    %v963 = vpop.f32.mrb[0].mxu0
    %964 = vmatprep.mubr.bf16.mxu0 0
    %965 = vmatmul.mubr.bf16.gmra.mrb[0].mxu0 %v880
    %v966 = vpop.f32.mrb[0].mxu0
    %v967 = vadd.f32 %v850, %v966
    %v968 = vpop.f32.mrb[0].mxu0
    %v969 = vpop.f32.mrb[0].mxu0
    %v970 = vadd.f32 %v850, %v969
    %v971 = vpop.f32.mrb[0].mxu0
    %972 = vmatprep.mubr.bf16.mxu0 0
    %973 = vmatmul.mubr.bf16.gmra.mrb[0].mxu0 %v883
    %v974 = vpop.f32.mrb[0].mxu0
    %v975 = vadd.f32 %v850, %v974
    %v976 = vpop.f32.mrb[0].mxu0
    %v977 = vpop.f32.mrb[0].mxu0
    %v978 = vadd.f32 %v850, %v977
    %v979 = vpop.f32.mrb[0].mxu0
    %980 = vmatprep.mubr.bf16.mxu0 0
    %981 = vmatmul.mubr.bf16.gmra.mrb[0].mxu0 %v886
    %v982 = vpop.f32.mrb[0].mxu0
    %v983 = vadd.f32 %v850, %v982
    %v984 = vpop.f32.mrb[0].mxu0
    %v985 = vpop.f32.mrb[0].mxu0
    %v986 = vadd.f32 %v850, %v985
    %v987 = vpop.f32.mrb[0].mxu0
    %988 = vmatprep.mubr.bf16.mxu0 0
    %989 = vmatmul.mubr.bf16.gmra.mrb[0].mxu0 %v889
    %v990 = vpop.f32.mrb[0].mxu0
    %v991 = vadd.f32 %v850, %v990
    %v992 = vpop.f32.mrb[0].mxu0
    %v993 = vpop.f32.mrb[0].mxu0
    %v994 = vadd.f32 %v850, %v993
    %v995 = vpop.f32.mrb[0].mxu0
    %996 = vmatprep.mubr.bf16.mxu0 0
    %997 = vmatmul.mubr.bf16.gmra.mrb[0].mxu0 %v892
    %v998 = vpop.f32.mrb[0].mxu0
    %v999 = vadd.f32 %v850, %v998
    %v1000 = vpop.f32.mrb[0].mxu0
    %v1001 = vpop.f32.mrb[0].mxu0
    %v1002 = vadd.f32 %v850, %v1001
    %v1003 = vpop.f32.mrb[0].mxu0
    %1004 = vmatprep.mubr.bf16.mxu0 0
    %1005 = vmatmul.mubr.bf16.gmra.mrb[0].mxu0 %v895
    %v1006 = vpop.f32.mrb[0].mxu0
    %v1007 = vadd.f32 %v850, %v1006
    %v1008 = vpop.f32.mrb[0].mxu0
    %v1009 = vpop.f32.mrb[0].mxu0
    %v1010 = vadd.f32 %v850, %v1009
    %v1011 = vpop.f32.mrb[0].mxu0
    %1012 = vmatprep.mubr.bf16.mxu0 0
    %1013 = vmatmul.mubr.bf16.gmra.mrb[0].mxu0 %v898
    %v1014 = vpop.f32.mrb[0].mxu0
    %v1015 = vadd.f32 %v850, %v1014
    %v1016 = vpop.f32.mrb[0].mxu0
    %v1017 = vpop.f32.mrb[0].mxu0
    %v1018 = vadd.f32 %v850, %v1017
    %v1019 = vpop.f32.mrb[0].mxu0
    %1020 = vmatprep.mubr.bf16.mxu0 0
    %1021 = vmatmul.mubr.bf16.gmra.mrb[0].mxu0 %v901
    %v1022 = vpop.f32.mrb[0].mxu0
    %v1023 = vadd.f32 %v850, %v1022
    %v1024 = vpop.f32.mrb[0].mxu0
    %v1025 = vpop.f32.mrb[0].mxu0
    %v1026 = vadd.f32 %v850, %v1025
    %v1027 = vpop.f32.mrb[0].mxu0
    %1028 = vmatprep.mubr.bf16.mxu0 0
    %1029 = vmatmul.mubr.bf16.gmra.mrb[0].mxu0 %v904
    %v1030 = vpop.f32.mrb[0].mxu0
    %v1031 = vadd.f32 %v850, %v1030
    %v1032 = vpop.f32.mrb[0].mxu0
    %v1033 = vpop.f32.mrb[0].mxu0
    %v1034 = vadd.f32 %v850, %v1033
    %v1035 = vpop.f32.mrb[0].mxu0
    %1036 = vmatprep.mubr.bf16.mxu0 0
    %1037 = vmatmul.mubr.bf16.gmra.mrb[0].mxu0 %v907
    %v1038 = vpop.f32.mrb[0].mxu0
    %v1039 = vadd.f32 %v850, %v1038
    %v1040 = vpop.f32.mrb[0].mxu0
    %v1041 = vpop.f32.mrb[0].mxu0
    %v1042 = vadd.f32 %v850, %v1041
    %v1043 = vpop.f32.mrb[0].mxu0
    %1044 = vmatprep.mubr.bf16.mxu0 0
    %1045 = vmatmul.mubr.bf16.gmra.mrb[0].mxu0 %v910
    %v1046 = vpop.f32.mrb[0].mxu0
    %v1047 = vadd.f32 %v850, %v1046
    %v1048 = vpop.f32.mrb[0].mxu0
    %v1049 = vpop.f32.mrb[0].mxu0
    %v1050 = vadd.f32 %v850, %v1049
    %v1051 = vpop.f32.mrb[0].mxu0
    %1052 = vmatprep.mubr.bf16.mxu0 0
    %1053 = vmatmul.mubr.bf16.gmra.mrb[0].mxu0 %v913
    %v1054 = vpop.f32.mrb[0].mxu0
    %v1055 = vadd.f32 %v850, %v1054
    %v1056 = vpop.f32.mrb[0].mxu0
    %v1057 = vpop.f32.mrb[0].mxu0
    %v1058 = vadd.f32 %v850, %v1057
    %v1059 = vpop.f32.mrb[0].mxu0
    %1060 = vmatprep.mubr.bf16.mxu0 0
    %1061 = vmatmul.mubr.bf16.gmra.mrb[0].mxu0 %v916
    %v1062 = vpop.f32.mrb[0].mxu0
    %v1063 = vadd.f32 %v850, %v1062
    %v1064 = vpop.f32.mrb[0].mxu0
    %v1065 = vpop.f32.mrb[0].mxu0
    %v1066 = vadd.f32 %v850, %v1065
    %v1067 = vpop.f32.mrb[0].mxu0
    %1068 = vmatprep.mubr.bf16.mxu0 0
    %1069 = vmatmul.mubr.bf16.gmra.mrb[0].mxu0 %v919
    %v1070 = vpop.f32.mrb[0].mxu0
    %v1071 = vadd.f32 %v850, %v1070
    %v1072 = vpop.f32.mrb[0].mxu0
    %v1073 = vpop.f32.mrb[0].mxu0
    %v1074 = vadd.f32 %v850, %v1073
    %v1075 = vpop.f32.mrb[0].mxu0
    %1076 = vmatprep.mubr.bf16.mxu0 0
    %1077 = vmatmul.mubr.bf16.gmra.mrb[0].mxu0 %v922
    %v1078 = vpop.f32.mrb[0].mxu0
    %v1079 = vadd.f32 %v850, %v1078
    %v1080 = vpop.f32.mrb[0].mxu0
    %v1081 = vpop.f32.mrb[0].mxu0
    %v1082 = vadd.f32 %v850, %v1081
    %v1083 = vpop.f32.mrb[0].mxu0
    %1084 = vdwg.mxu0
    %v1085 = vmax.f32 %v959, 0.0
    %v1086 = vmax.f32 %v962, 0.0
    %v1087 = vmax.f32 %v967, 0.0
    %v1088 = vmax.f32 %v970, 0.0
    %v1089 = vmax.f32 %v975, 0.0
    %v1090 = vmax.f32 %v978, 0.0
    %v1091 = vmax.f32 %v983, 0.0
    %v1092 = vmax.f32 %v986, 0.0
    %v1093 = vmax.f32 %v991, 0.0
    %v1094 = vmax.f32 %v994, 0.0
    %v1095 = vmax.f32 %v999, 0.0
    %v1096 = vmax.f32 %v1002, 0.0
    %v1097 = vmax.f32 %v1007, 0.0
    %v1098 = vmax.f32 %v1010, 0.0
    %v1099 = vmax.f32 %v1015, 0.0
    %v1100 = vmax.f32 %v1018, 0.0
    %v1101 = vmax.f32 %v1023, 0.0
    %v1102 = vmax.f32 %v1026, 0.0
    %v1103 = vmax.f32 %v1031, 0.0
    %v1104 = vmax.f32 %v1034, 0.0
    %v1105 = vmax.f32 %v1039, 0.0
    %v1106 = vmax.f32 %v1042, 0.0
    %v1107 = vmax.f32 %v1047, 0.0
    %v1108 = vmax.f32 %v1050, 0.0
    %v1109 = vmax.f32 %v1055, 0.0
    %v1110 = vmax.f32 %v1058, 0.0
    %v1111 = vmax.f32 %v1063, 0.0
    %v1112 = vmax.f32 %v1066, 0.0
    %v1113 = vmax.f32 %v1071, 0.0
    %v1114 = vmax.f32 %v1074, 0.0
    %v1115 = vmax.f32 %v1079, 0.0
    %v1116 = vmax.f32 %v1082, 0.0
    %v1117 = vpack.c.bf16 %v1086, %v1085
    %v1118 = vpack.c.bf16 %v1088, %v1087
    %v1119 = vpack.c.bf16 %v1090, %v1089
    %v1120 = vpack.c.bf16 %v1092, %v1091
    %v1121 = vpack.c.bf16 %v1094, %v1093
    %v1122 = vpack.c.bf16 %v1096, %v1095
    %v1123 = vpack.c.bf16 %v1098, %v1097
    %v1124 = vpack.c.bf16 %v1100, %v1099
    %v1125 = vpack.c.bf16 %v1102, %v1101
    %v1126 = vpack.c.bf16 %v1104, %v1103
    %v1127 = vpack.c.bf16 %v1106, %v1105
    %v1128 = vpack.c.bf16 %v1108, %v1107
    %v1129 = vpack.c.bf16 %v1110, %v1109
    %v1130 = vpack.c.bf16 %v1112, %v1111
    %v1131 = vpack.c.bf16 %v1114, %v1113
    %v1132 = vpack.c.bf16 %v1116, %v1115
    %v1133 = vld [vmem:[#allocation2 + $0x168] sm:$0xf]
    %v1134 = vld [vmem:[#allocation2 + $0x170] sm:$0xf]
    %v1135 = vld [vmem:[#allocation2 + $0x178] sm:$0xf]
    %v1136 = vld [vmem:[#allocation2 + $0x180] sm:$0xf]
    %v1137 = vld [vmem:[#allocation2 + $0x188] sm:$0xf]
    %v1138 = vld [vmem:[#allocation2 + $0x190] sm:$0xf]
    %v1139 = vld [vmem:[%s2 + $0x3] ss:$0 sm:$0xff]
    %v1146 = vunpack.c.l.b16 %v1133
    %v1147 = vunpack.c.l.b16 %v1134
    %v1148 = vunpack.c.l.b16 %v1135
    %v1149 = vunpack.c.l.b16 %v1136
    %v1150 = vunpack.c.l.b16 %v1137
    %v1151 = vunpack.c.l.b16 %v1138
    %v1152 = vpack.c.b16 %v1147, %v1146
    %v1153 = vpack.c.b16 %v1149, %v1148
    %v1154 = vpack.c.b16 %v1151, %v1150
    %vm1158 = vcmask 392192
    %v1160 = vsel %vm1158, %v1117, 0
    %v1163 = vsel %vm1158, %v1118, 0
    %v1166 = vsel %vm1158, %v1119, 0
    %v1169 = vsel %vm1158, %v1120, 0
    %v1172 = vsel %vm1158, %v1121, 0
    %v1175 = vsel %vm1158, %v1122, 0
    %v1178 = vsel %vm1158, %v1123, 0
    %v1181 = vsel %vm1158, %v1124, 0
    %v1184 = vsel %vm1158, %v1125, 0
    %v1187 = vsel %vm1158, %v1126, 0
    %v1190 = vsel %vm1158, %v1127, 0
    %v1193 = vsel %vm1158, %v1128, 0
    %v1196 = vsel %vm1158, %v1129, 0
    %v1199 = vsel %vm1158, %v1130, 0
    %v1202 = vsel %vm1158, %v1131, 0
    %v1205 = vsel %vm1158, %v1132, 0
    %1207 = vmatprep.subr.bf16.mxu0 0
    %1208 = vmatpush1.bf16.msra.mxu0 %v1152
    %1209 = vmatprep.subr.bf16.mxu0 0
    %1210 = vmatpush1.bf16.msra.mxu0 %v1153
    %1211 = vmatprep.subr.bf16.mxu0 0
    %1212 = vmatpush1.bf16.msra.mxu0 %v1154
    %1213 = vmatprep.subr.bf16.mxu0 0
    %1214 = vmatpush1.bf16.msra.mxu0 0
    %1215 = vmatprep.subr.bf16.mxu0 0
    %1216 = vmatpush1.bf16.msra.mxu0 0
    %1217 = vmatprep.subr.bf16.mxu0 0
    %1218 = vmatpush1.bf16.msra.mxu0 0
    %1219 = vmatprep.subr.bf16.mxu0 0
    %1220 = vmatpush1.bf16.msra.mxu0 0
    %1221 = vmatprep.subr.bf16.mxu0 0
    %1222 = vmatpush1.bf16.msra.mxu0 0
    %1223 = vmatprep.subr.bf16.mxu0 0
    %1224 = vmatpush1.bf16.msra.mxu0 0
    %1225 = vmatprep.subr.bf16.mxu0 0
    %1226 = vmatpush1.bf16.msra.mxu0 0
    %1227 = vmatprep.subr.bf16.mxu0 0
    %1228 = vmatpush1.bf16.msra.mxu0 0
    %1229 = vmatprep.subr.bf16.mxu0 0
    %1230 = vmatpush1.bf16.msra.mxu0 0
    %1231 = vmatprep.subr.bf16.mxu0 0
    %1232 = vmatpush1.bf16.msra.mxu0 0
    %1233 = vmatprep.subr.bf16.mxu0 0
    %1234 = vmatpush1.bf16.msra.mxu0 0
    %1235 = vmatprep.subr.bf16.mxu0 0
    %1236 = vmatpush1.bf16.msra.mxu0 0
    %1237 = vmatprep.subr.bf16.mxu0 0
    %1238 = vmatpush1.bf16.msra.mxu0 0
    %1239 = vmatprep.mubr.bf16.mxu0 0
    %1240 = vmatmul.mubr.bf16.gmra.mrb[0].mxu0 %v1160
    %v1241 = vpop.f32.mrb[0].mxu0
    %v1242 = vadd.f32 %v1139, %v1241
    %v1243 = vpop.f32.mrb[0].mxu0
    %v1244 = vpop.f32.mrb[0].mxu0
    %v1245 = vadd.f32 %v1139, %v1244
    %v1246 = vpop.f32.mrb[0].mxu0
    %1247 = vmatprep.mubr.bf16.mxu0 0
    %1248 = vmatmul.mubr.bf16.gmra.mrb[0].mxu0 %v1163
    %v1249 = vpop.f32.mrb[0].mxu0
    %v1250 = vadd.f32 %v1139, %v1249
    %v1251 = vpop.f32.mrb[0].mxu0
    %v1252 = vpop.f32.mrb[0].mxu0
    %v1253 = vadd.f32 %v1139, %v1252
    %v1254 = vpop.f32.mrb[0].mxu0
    %1255 = vmatprep.mubr.bf16.mxu0 0
    %1256 = vmatmul.mubr.bf16.gmra.mrb[0].mxu0 %v1166
    %v1257 = vpop.f32.mrb[0].mxu0
    %v1258 = vadd.f32 %v1139, %v1257
    %v1259 = vpop.f32.mrb[0].mxu0
    %v1260 = vpop.f32.mrb[0].mxu0
    %v1261 = vadd.f32 %v1139, %v1260
    %v1262 = vpop.f32.mrb[0].mxu0
    %1263 = vmatprep.mubr.bf16.mxu0 0
    %1264 = vmatmul.mubr.bf16.gmra.mrb[0].mxu0 %v1169
    %v1265 = vpop.f32.mrb[0].mxu0
    %v1266 = vadd.f32 %v1139, %v1265
    %v1267 = vpop.f32.mrb[0].mxu0
    %v1268 = vpop.f32.mrb[0].mxu0
    %v1269 = vadd.f32 %v1139, %v1268
    %v1270 = vpop.f32.mrb[0].mxu0
    %1271 = vmatprep.mubr.bf16.mxu0 0
    %1272 = vmatmul.mubr.bf16.gmra.mrb[0].mxu0 %v1172
    %v1273 = vpop.f32.mrb[0].mxu0
    %v1274 = vadd.f32 %v1139, %v1273
    %v1275 = vpop.f32.mrb[0].mxu0
    %v1276 = vpop.f32.mrb[0].mxu0
    %v1277 = vadd.f32 %v1139, %v1276
    %v1278 = vpop.f32.mrb[0].mxu0
    %1279 = vmatprep.mubr.bf16.mxu0 0
    %1280 = vmatmul.mubr.bf16.gmra.mrb[0].mxu0 %v1175
    %v1281 = vpop.f32.mrb[0].mxu0
    %v1282 = vadd.f32 %v1139, %v1281
    %v1283 = vpop.f32.mrb[0].mxu0
    %v1284 = vpop.f32.mrb[0].mxu0
    %v1285 = vadd.f32 %v1139, %v1284
    %v1286 = vpop.f32.mrb[0].mxu0
    %1287 = vmatprep.mubr.bf16.mxu0 0
    %1288 = vmatmul.mubr.bf16.gmra.mrb[0].mxu0 %v1178
    %v1289 = vpop.f32.mrb[0].mxu0
    %v1290 = vadd.f32 %v1139, %v1289
    %v1291 = vpop.f32.mrb[0].mxu0
    %v1292 = vpop.f32.mrb[0].mxu0
    %v1293 = vadd.f32 %v1139, %v1292
    %v1294 = vpop.f32.mrb[0].mxu0
    %1295 = vmatprep.mubr.bf16.mxu0 0
    %1296 = vmatmul.mubr.bf16.gmra.mrb[0].mxu0 %v1181
    %v1297 = vpop.f32.mrb[0].mxu0
    %v1298 = vadd.f32 %v1139, %v1297
    %v1299 = vpop.f32.mrb[0].mxu0
    %v1300 = vpop.f32.mrb[0].mxu0
    %v1301 = vadd.f32 %v1139, %v1300
    %v1302 = vpop.f32.mrb[0].mxu0
    %1303 = vmatprep.mubr.bf16.mxu0 0
    %1304 = vmatmul.mubr.bf16.gmra.mrb[0].mxu0 %v1184
    %v1305 = vpop.f32.mrb[0].mxu0
    %v1306 = vadd.f32 %v1139, %v1305
    %v1307 = vpop.f32.mrb[0].mxu0
    %v1308 = vpop.f32.mrb[0].mxu0
    %v1309 = vadd.f32 %v1139, %v1308
    %v1310 = vpop.f32.mrb[0].mxu0
    %1311 = vmatprep.mubr.bf16.mxu0 0
    %1312 = vmatmul.mubr.bf16.gmra.mrb[0].mxu0 %v1187
    %v1313 = vpop.f32.mrb[0].mxu0
    %v1314 = vadd.f32 %v1139, %v1313
    %v1315 = vpop.f32.mrb[0].mxu0
    %v1316 = vpop.f32.mrb[0].mxu0
    %v1317 = vadd.f32 %v1139, %v1316
    %v1318 = vpop.f32.mrb[0].mxu0
    %1319 = vmatprep.mubr.bf16.mxu0 0
    %1320 = vmatmul.mubr.bf16.gmra.mrb[0].mxu0 %v1190
    %v1321 = vpop.f32.mrb[0].mxu0
    %v1322 = vadd.f32 %v1139, %v1321
    %v1323 = vpop.f32.mrb[0].mxu0
    %v1324 = vpop.f32.mrb[0].mxu0
    %v1325 = vadd.f32 %v1139, %v1324
    %v1326 = vpop.f32.mrb[0].mxu0
    %1327 = vmatprep.mubr.bf16.mxu0 0
    %1328 = vmatmul.mubr.bf16.gmra.mrb[0].mxu0 %v1193
    %v1329 = vpop.f32.mrb[0].mxu0
    %v1330 = vadd.f32 %v1139, %v1329
    %v1331 = vpop.f32.mrb[0].mxu0
    %v1332 = vpop.f32.mrb[0].mxu0
    %v1333 = vadd.f32 %v1139, %v1332
    %v1334 = vpop.f32.mrb[0].mxu0
    %1335 = vmatprep.mubr.bf16.mxu0 0
    %1336 = vmatmul.mubr.bf16.gmra.mrb[0].mxu0 %v1196
    %v1337 = vpop.f32.mrb[0].mxu0
    %v1338 = vadd.f32 %v1139, %v1337
    %v1339 = vpop.f32.mrb[0].mxu0
    %v1340 = vpop.f32.mrb[0].mxu0
    %v1341 = vadd.f32 %v1139, %v1340
    %v1342 = vpop.f32.mrb[0].mxu0
    %1343 = vmatprep.mubr.bf16.mxu0 0
    %1344 = vmatmul.mubr.bf16.gmra.mrb[0].mxu0 %v1199
    %v1345 = vpop.f32.mrb[0].mxu0
    %v1346 = vadd.f32 %v1139, %v1345
    %v1347 = vpop.f32.mrb[0].mxu0
    %v1348 = vpop.f32.mrb[0].mxu0
    %v1349 = vadd.f32 %v1139, %v1348
    %v1350 = vpop.f32.mrb[0].mxu0
    %1351 = vmatprep.mubr.bf16.mxu0 0
    %1352 = vmatmul.mubr.bf16.gmra.mrb[0].mxu0 %v1202
    %v1353 = vpop.f32.mrb[0].mxu0
    %v1354 = vadd.f32 %v1139, %v1353
    %v1355 = vpop.f32.mrb[0].mxu0
    %v1356 = vpop.f32.mrb[0].mxu0
    %v1357 = vadd.f32 %v1139, %v1356
    %v1358 = vpop.f32.mrb[0].mxu0
    %1359 = vmatprep.mubr.bf16.mxu0 0
    %1360 = vmatmul.mubr.bf16.gmra.mrb[0].mxu0 %v1205
    %v1361 = vpop.f32.mrb[0].mxu0
    %v1362 = vadd.f32 %v1139, %v1361
    %v1363 = vpop.f32.mrb[0].mxu0
    %v1364 = vpop.f32.mrb[0].mxu0
    %v1365 = vadd.f32 %v1139, %v1364
    %v1366 = vpop.f32.mrb[0].mxu0
    %1367 = vdwg.mxu0
    %v1368 = vmax.f32 %v1242, 0.0
    %v1369 = vmax.f32 %v1245, 0.0
    %v1370 = vmax.f32 %v1250, 0.0
    %v1371 = vmax.f32 %v1253, 0.0
    %v1372 = vmax.f32 %v1258, 0.0
    %v1373 = vmax.f32 %v1261, 0.0
    %v1374 = vmax.f32 %v1266, 0.0
    %v1375 = vmax.f32 %v1269, 0.0
    %v1376 = vmax.f32 %v1274, 0.0
    %v1377 = vmax.f32 %v1277, 0.0
    %v1378 = vmax.f32 %v1282, 0.0
    %v1379 = vmax.f32 %v1285, 0.0
    %v1380 = vmax.f32 %v1290, 0.0
    %v1381 = vmax.f32 %v1293, 0.0
    %v1382 = vmax.f32 %v1298, 0.0
    %v1383 = vmax.f32 %v1301, 0.0
    %v1384 = vmax.f32 %v1306, 0.0
    %v1385 = vmax.f32 %v1309, 0.0
    %v1386 = vmax.f32 %v1314, 0.0
    %v1387 = vmax.f32 %v1317, 0.0
    %v1388 = vmax.f32 %v1322, 0.0
    %v1389 = vmax.f32 %v1325, 0.0
    %v1390 = vmax.f32 %v1330, 0.0
    %v1391 = vmax.f32 %v1333, 0.0
    %v1392 = vmax.f32 %v1338, 0.0
    %v1393 = vmax.f32 %v1341, 0.0
    %v1394 = vmax.f32 %v1346, 0.0
    %v1395 = vmax.f32 %v1349, 0.0
    %v1396 = vmax.f32 %v1354, 0.0
    %v1397 = vmax.f32 %v1357, 0.0
    %v1398 = vmax.f32 %v1362, 0.0
    %v1399 = vmax.f32 %v1365, 0.0
    %v1400 = vpack.c.bf16 %v1369, %v1368
    %v1401 = vpack.c.bf16 %v1371, %v1370
    %v1402 = vpack.c.bf16 %v1373, %v1372
    %v1403 = vpack.c.bf16 %v1375, %v1374
    %v1404 = vpack.c.bf16 %v1377, %v1376
    %v1405 = vpack.c.bf16 %v1379, %v1378
    %v1406 = vpack.c.bf16 %v1381, %v1380
    %v1407 = vpack.c.bf16 %v1383, %v1382
    %v1408 = vpack.c.bf16 %v1385, %v1384
    %v1409 = vpack.c.bf16 %v1387, %v1386
    %v1410 = vpack.c.bf16 %v1389, %v1388
    %v1411 = vpack.c.bf16 %v1391, %v1390
    %v1412 = vpack.c.bf16 %v1393, %v1392
    %v1413 = vpack.c.bf16 %v1395, %v1394
    %v1414 = vpack.c.bf16 %v1397, %v1396
    %v1415 = vpack.c.bf16 %v1399, %v1398
    %v1416 = vld [vmem:[#allocation2 + $0x198] sm:$0xf]
    %v1417 = vld [vmem:[#allocation2 + $0x1a0] sm:$0xf]
    %v1418 = vld [vmem:[#allocation2 + $0x1a8] sm:$0xf]
    %v1419 = vld [vmem:[#allocation2 + $0x1b0] sm:$0xf]
    %v1420 = vld [vmem:[%s2 + $0x4] ss:$0 sm:$0xff]
    %v1425 = vunpack.c.l.b16 %v1416
    %v1426 = vunpack.c.l.b16 %v1417
    %v1427 = vunpack.c.l.b16 %v1418
    %v1428 = vunpack.c.l.b16 %v1419
    %v1429 = vpack.c.b16 %v1426, %v1425
    %v1430 = vpack.c.b16 %v1428, %v1427
    %vm1433 = vcmask 261120
    %v1435 = vsel %vm1433, %v1400, 0
    %v1438 = vsel %vm1433, %v1401, 0
    %v1441 = vsel %vm1433, %v1402, 0
    %v1444 = vsel %vm1433, %v1403, 0
    %v1447 = vsel %vm1433, %v1404, 0
    %v1450 = vsel %vm1433, %v1405, 0
    %v1453 = vsel %vm1433, %v1406, 0
    %v1456 = vsel %vm1433, %v1407, 0
    %v1459 = vsel %vm1433, %v1408, 0
    %v1462 = vsel %vm1433, %v1409, 0
    %v1465 = vsel %vm1433, %v1410, 0
    %v1468 = vsel %vm1433, %v1411, 0
    %v1471 = vsel %vm1433, %v1412, 0
    %v1474 = vsel %vm1433, %v1413, 0
    %v1477 = vsel %vm1433, %v1414, 0
    %v1480 = vsel %vm1433, %v1415, 0
    %1482 = vmatprep.subr.bf16.mxu0 0
    %1483 = vmatpush1.bf16.msra.mxu0 %v1429
    %1484 = vmatprep.subr.bf16.mxu0 0
    %1485 = vmatpush1.bf16.msra.mxu0 %v1430
    %1486 = vmatprep.subr.bf16.mxu0 0
    %1487 = vmatpush1.bf16.msra.mxu0 0
    %1488 = vmatprep.subr.bf16.mxu0 0
    %1489 = vmatpush1.bf16.msra.mxu0 0
    %1490 = vmatprep.subr.bf16.mxu0 0
    %1491 = vmatpush1.bf16.msra.mxu0 0
    %1492 = vmatprep.subr.bf16.mxu0 0
    %1493 = vmatpush1.bf16.msra.mxu0 0
    %1494 = vmatprep.subr.bf16.mxu0 0
    %1495 = vmatpush1.bf16.msra.mxu0 0
    %1496 = vmatprep.subr.bf16.mxu0 0
    %1497 = vmatpush1.bf16.msra.mxu0 0
    %1498 = vmatprep.subr.bf16.mxu0 0
    %1499 = vmatpush1.bf16.msra.mxu0 0
    %1500 = vmatprep.subr.bf16.mxu0 0
    %1501 = vmatpush1.bf16.msra.mxu0 0
    %1502 = vmatprep.subr.bf16.mxu0 0
    %1503 = vmatpush1.bf16.msra.mxu0 0
    %1504 = vmatprep.subr.bf16.mxu0 0
    %1505 = vmatpush1.bf16.msra.mxu0 0
    %1506 = vmatprep.subr.bf16.mxu0 0
    %1507 = vmatpush1.bf16.msra.mxu0 0
    %1508 = vmatprep.subr.bf16.mxu0 0
    %1509 = vmatpush1.bf16.msra.mxu0 0
    %1510 = vmatprep.subr.bf16.mxu0 0
    %1511 = vmatpush1.bf16.msra.mxu0 0
    %1512 = vmatprep.subr.bf16.mxu0 0
    %1513 = vmatpush1.bf16.msra.mxu0 0
    %1514 = vmatprep.mubr.bf16.mxu0 0
    %1515 = vmatmul.mubr.bf16.gmra.mrb[0].mxu0 %v1435
    %v1516 = vpop.f32.mrb[0].mxu0
    %v1517 = vadd.f32 %v1420, %v1516
    %v1518 = vpop.f32.mrb[0].mxu0
    %v1519 = vpop.f32.mrb[0].mxu0
    %v1520 = vadd.f32 %v1420, %v1519
    %v1521 = vpop.f32.mrb[0].mxu0
    %1522 = vmatprep.mubr.bf16.mxu0 0
    %1523 = vmatmul.mubr.bf16.gmra.mrb[0].mxu0 %v1438
    %v1524 = vpop.f32.mrb[0].mxu0
    %v1525 = vadd.f32 %v1420, %v1524
    %v1526 = vpop.f32.mrb[0].mxu0
    %v1527 = vpop.f32.mrb[0].mxu0
    %v1528 = vadd.f32 %v1420, %v1527
    %v1529 = vpop.f32.mrb[0].mxu0
    %1530 = vmatprep.mubr.bf16.mxu0 0
    %1531 = vmatmul.mubr.bf16.gmra.mrb[0].mxu0 %v1441
    %v1532 = vpop.f32.mrb[0].mxu0
    %v1533 = vadd.f32 %v1420, %v1532
    %v1534 = vpop.f32.mrb[0].mxu0
    %v1535 = vpop.f32.mrb[0].mxu0
    %v1536 = vadd.f32 %v1420, %v1535
    %v1537 = vpop.f32.mrb[0].mxu0
    %1538 = vmatprep.mubr.bf16.mxu0 0
    %1539 = vmatmul.mubr.bf16.gmra.mrb[0].mxu0 %v1444
    %v1540 = vpop.f32.mrb[0].mxu0
    %v1541 = vadd.f32 %v1420, %v1540
    %v1542 = vpop.f32.mrb[0].mxu0
    %v1543 = vpop.f32.mrb[0].mxu0
    %v1544 = vadd.f32 %v1420, %v1543
    %v1545 = vpop.f32.mrb[0].mxu0
    %1546 = vmatprep.mubr.bf16.mxu0 0
    %1547 = vmatmul.mubr.bf16.gmra.mrb[0].mxu0 %v1447
    %v1548 = vpop.f32.mrb[0].mxu0
    %v1549 = vadd.f32 %v1420, %v1548
    %v1550 = vpop.f32.mrb[0].mxu0
    %v1551 = vpop.f32.mrb[0].mxu0
    %v1552 = vadd.f32 %v1420, %v1551
    %v1553 = vpop.f32.mrb[0].mxu0
    %1554 = vmatprep.mubr.bf16.mxu0 0
    %1555 = vmatmul.mubr.bf16.gmra.mrb[0].mxu0 %v1450
    %v1556 = vpop.f32.mrb[0].mxu0
    %v1557 = vadd.f32 %v1420, %v1556
    %v1558 = vpop.f32.mrb[0].mxu0
    %v1559 = vpop.f32.mrb[0].mxu0
    %v1560 = vadd.f32 %v1420, %v1559
    %v1561 = vpop.f32.mrb[0].mxu0
    %1562 = vmatprep.mubr.bf16.mxu0 0
    %1563 = vmatmul.mubr.bf16.gmra.mrb[0].mxu0 %v1453
    %v1564 = vpop.f32.mrb[0].mxu0
    %v1565 = vadd.f32 %v1420, %v1564
    %v1566 = vpop.f32.mrb[0].mxu0
    %v1567 = vpop.f32.mrb[0].mxu0
    %v1568 = vadd.f32 %v1420, %v1567
    %v1569 = vpop.f32.mrb[0].mxu0
    %1570 = vmatprep.mubr.bf16.mxu0 0
    %1571 = vmatmul.mubr.bf16.gmra.mrb[0].mxu0 %v1456
    %v1572 = vpop.f32.mrb[0].mxu0
    %v1573 = vadd.f32 %v1420, %v1572
    %v1574 = vpop.f32.mrb[0].mxu0
    %v1575 = vpop.f32.mrb[0].mxu0
    %v1576 = vadd.f32 %v1420, %v1575
    %v1577 = vpop.f32.mrb[0].mxu0
    %1578 = vmatprep.mubr.bf16.mxu0 0
    %1579 = vmatmul.mubr.bf16.gmra.mrb[0].mxu0 %v1459
    %v1580 = vpop.f32.mrb[0].mxu0
    %v1581 = vadd.f32 %v1420, %v1580
    %v1582 = vpop.f32.mrb[0].mxu0
    %v1583 = vpop.f32.mrb[0].mxu0
    %v1584 = vadd.f32 %v1420, %v1583
    %v1585 = vpop.f32.mrb[0].mxu0
    %1586 = vmatprep.mubr.bf16.mxu0 0
    %1587 = vmatmul.mubr.bf16.gmra.mrb[0].mxu0 %v1462
    %v1588 = vpop.f32.mrb[0].mxu0
    %v1589 = vadd.f32 %v1420, %v1588
    %v1590 = vpop.f32.mrb[0].mxu0
    %v1591 = vpop.f32.mrb[0].mxu0
    %v1592 = vadd.f32 %v1420, %v1591
    %v1593 = vpop.f32.mrb[0].mxu0
    %1594 = vmatprep.mubr.bf16.mxu0 0
    %1595 = vmatmul.mubr.bf16.gmra.mrb[0].mxu0 %v1465
    %v1596 = vpop.f32.mrb[0].mxu0
    %v1597 = vadd.f32 %v1420, %v1596
    %v1598 = vpop.f32.mrb[0].mxu0
    %v1599 = vpop.f32.mrb[0].mxu0
    %v1600 = vadd.f32 %v1420, %v1599
    %v1601 = vpop.f32.mrb[0].mxu0
    %1602 = vmatprep.mubr.bf16.mxu0 0
    %1603 = vmatmul.mubr.bf16.gmra.mrb[0].mxu0 %v1468
    %v1604 = vpop.f32.mrb[0].mxu0
    %v1605 = vadd.f32 %v1420, %v1604
    %v1606 = vpop.f32.mrb[0].mxu0
    %v1607 = vpop.f32.mrb[0].mxu0
    %v1608 = vadd.f32 %v1420, %v1607
    %v1609 = vpop.f32.mrb[0].mxu0
    %1610 = vmatprep.mubr.bf16.mxu0 0
    %1611 = vmatmul.mubr.bf16.gmra.mrb[0].mxu0 %v1471
    %v1612 = vpop.f32.mrb[0].mxu0
    %v1613 = vadd.f32 %v1420, %v1612
    %v1614 = vpop.f32.mrb[0].mxu0
    %v1615 = vpop.f32.mrb[0].mxu0
    %v1616 = vadd.f32 %v1420, %v1615
    %v1617 = vpop.f32.mrb[0].mxu0
    %1618 = vmatprep.mubr.bf16.mxu0 0
    %1619 = vmatmul.mubr.bf16.gmra.mrb[0].mxu0 %v1474
    %v1620 = vpop.f32.mrb[0].mxu0
    %v1621 = vadd.f32 %v1420, %v1620
    %v1622 = vpop.f32.mrb[0].mxu0
    %v1623 = vpop.f32.mrb[0].mxu0
    %v1624 = vadd.f32 %v1420, %v1623
    %v1625 = vpop.f32.mrb[0].mxu0
    %1626 = vmatprep.mubr.bf16.mxu0 0
    %1627 = vmatmul.mubr.bf16.gmra.mrb[0].mxu0 %v1477
    %v1628 = vpop.f32.mrb[0].mxu0
    %v1629 = vadd.f32 %v1420, %v1628
    %v1630 = vpop.f32.mrb[0].mxu0
    %v1631 = vpop.f32.mrb[0].mxu0
    %v1632 = vadd.f32 %v1420, %v1631
    %v1633 = vpop.f32.mrb[0].mxu0
    %1634 = vmatprep.mubr.bf16.mxu0 0
    %1635 = vmatmul.mubr.bf16.gmra.mrb[0].mxu0 %v1480
    %v1636 = vpop.f32.mrb[0].mxu0
    %v1637 = vadd.f32 %v1420, %v1636
    %v1638 = vpop.f32.mrb[0].mxu0
    %v1639 = vpop.f32.mrb[0].mxu0
    %v1640 = vadd.f32 %v1420, %v1639
    %v1641 = vpop.f32.mrb[0].mxu0
    %1642 = vdwg.mxu0
    %v1643 = vmax.f32 %v1517, 0.0
    %v1644 = vmax.f32 %v1520, 0.0
    %v1645 = vmax.f32 %v1525, 0.0
    %v1646 = vmax.f32 %v1528, 0.0
    %v1647 = vmax.f32 %v1533, 0.0
    %v1648 = vmax.f32 %v1536, 0.0
    %v1649 = vmax.f32 %v1541, 0.0
    %v1650 = vmax.f32 %v1544, 0.0
    %v1651 = vmax.f32 %v1549, 0.0
    %v1652 = vmax.f32 %v1552, 0.0
    %v1653 = vmax.f32 %v1557, 0.0
    %v1654 = vmax.f32 %v1560, 0.0
    %v1655 = vmax.f32 %v1565, 0.0
    %v1656 = vmax.f32 %v1568, 0.0
    %v1657 = vmax.f32 %v1573, 0.0
    %v1658 = vmax.f32 %v1576, 0.0
    %v1659 = vmax.f32 %v1581, 0.0
    %v1660 = vmax.f32 %v1584, 0.0
    %v1661 = vmax.f32 %v1589, 0.0
    %v1662 = vmax.f32 %v1592, 0.0
    %v1663 = vmax.f32 %v1597, 0.0
    %v1664 = vmax.f32 %v1600, 0.0
    %v1665 = vmax.f32 %v1605, 0.0
    %v1666 = vmax.f32 %v1608, 0.0
    %v1667 = vmax.f32 %v1613, 0.0
    %v1668 = vmax.f32 %v1616, 0.0
    %v1669 = vmax.f32 %v1621, 0.0
    %v1670 = vmax.f32 %v1624, 0.0
    %v1671 = vmax.f32 %v1629, 0.0
    %v1672 = vmax.f32 %v1632, 0.0
    %v1673 = vmax.f32 %v1637, 0.0
    %v1674 = vmax.f32 %v1640, 0.0
    %v1675 = vpack.c.bf16 %v1644, %v1643
    %v1676 = vpack.c.bf16 %v1646, %v1645
    %v1677 = vpack.c.bf16 %v1648, %v1647
    %v1678 = vpack.c.bf16 %v1650, %v1649
    %v1679 = vpack.c.bf16 %v1652, %v1651
    %v1680 = vpack.c.bf16 %v1654, %v1653
    %v1681 = vpack.c.bf16 %v1656, %v1655
    %v1682 = vpack.c.bf16 %v1658, %v1657
    %v1683 = vpack.c.bf16 %v1660, %v1659
    %v1684 = vpack.c.bf16 %v1662, %v1661
    %v1685 = vpack.c.bf16 %v1664, %v1663
    %v1686 = vpack.c.bf16 %v1666, %v1665
    %v1687 = vpack.c.bf16 %v1668, %v1667
    %v1688 = vpack.c.bf16 %v1670, %v1669
    %v1689 = vpack.c.bf16 %v1672, %v1671
    %v1690 = vpack.c.bf16 %v1674, %v1673
    %v1691 = vld [vmem:[#allocation2 + $0x1b8] sm:$0xf]
    %v1692 = vld [vmem:[#allocation2 + $0x1c0] sm:$0xf]
    %v1693 = vld [vmem:[#allocation2 + $0x1c8] sm:$0xf]
    %v1694 = vld [vmem:[#allocation2 + $0x1d0] sm:$0xf]
    %v1695 = vld [vmem:[#allocation2 + $0x1d8] sm:$0xf]
    %v1696 = vld [vmem:[#allocation2 + $0x1e0] sm:$0xf]
    %v1697 = vld [vmem:[%s2 + $0x5] ss:$0 sm:$0xff]
    %v1704 = vunpack.c.l.b16 %v1691
    %v1705 = vunpack.c.l.b16 %v1692
    %v1706 = vunpack.c.l.b16 %v1693
    %v1707 = vunpack.c.l.b16 %v1694
    %v1708 = vunpack.c.l.b16 %v1695
    %v1709 = vunpack.c.l.b16 %v1696
    %v1710 = vpack.c.b16 %v1705, %v1704
    %v1711 = vpack.c.b16 %v1707, %v1706
    %v1712 = vpack.c.b16 %v1709, %v1708
    %v1717 = vsel %vm1158, %v1675, 0
    %v1720 = vsel %vm1158, %v1676, 0
    %v1723 = vsel %vm1158, %v1677, 0
    %v1726 = vsel %vm1158, %v1678, 0
    %v1729 = vsel %vm1158, %v1679, 0
    %v1732 = vsel %vm1158, %v1680, 0
    %v1735 = vsel %vm1158, %v1681, 0
    %v1738 = vsel %vm1158, %v1682, 0
    %v1741 = vsel %vm1158, %v1683, 0
    %v1744 = vsel %vm1158, %v1684, 0
    %v1747 = vsel %vm1158, %v1685, 0
    %v1750 = vsel %vm1158, %v1686, 0
    %v1753 = vsel %vm1158, %v1687, 0
    %v1756 = vsel %vm1158, %v1688, 0
    %v1759 = vsel %vm1158, %v1689, 0
    %v1762 = vsel %vm1158, %v1690, 0
    %1764 = vmatprep.subr.bf16.mxu0 0
    %1765 = vmatpush1.bf16.msra.mxu0 %v1710
    %1766 = vmatprep.subr.bf16.mxu0 0
    %1767 = vmatpush1.bf16.msra.mxu0 %v1711
    %1768 = vmatprep.subr.bf16.mxu0 0
    %1769 = vmatpush1.bf16.msra.mxu0 %v1712
    %1770 = vmatprep.subr.bf16.mxu0 0
    %1771 = vmatpush1.bf16.msra.mxu0 0
    %1772 = vmatprep.subr.bf16.mxu0 0
    %1773 = vmatpush1.bf16.msra.mxu0 0
    %1774 = vmatprep.subr.bf16.mxu0 0
    %1775 = vmatpush1.bf16.msra.mxu0 0
    %1776 = vmatprep.subr.bf16.mxu0 0
    %1777 = vmatpush1.bf16.msra.mxu0 0
    %1778 = vmatprep.subr.bf16.mxu0 0
    %1779 = vmatpush1.bf16.msra.mxu0 0
    %1780 = vmatprep.subr.bf16.mxu0 0
    %1781 = vmatpush1.bf16.msra.mxu0 0
    %1782 = vmatprep.subr.bf16.mxu0 0
    %1783 = vmatpush1.bf16.msra.mxu0 0
    %1784 = vmatprep.subr.bf16.mxu0 0
    %1785 = vmatpush1.bf16.msra.mxu0 0
    %1786 = vmatprep.subr.bf16.mxu0 0
    %1787 = vmatpush1.bf16.msra.mxu0 0
    %1788 = vmatprep.subr.bf16.mxu0 0
    %1789 = vmatpush1.bf16.msra.mxu0 0
    %1790 = vmatprep.subr.bf16.mxu0 0
    %1791 = vmatpush1.bf16.msra.mxu0 0
    %1792 = vmatprep.subr.bf16.mxu0 0
    %1793 = vmatpush1.bf16.msra.mxu0 0
    %1794 = vmatprep.subr.bf16.mxu0 0
    %1795 = vmatpush1.bf16.msra.mxu0 0
    %1796 = vmatprep.mubr.bf16.mxu0 0
    %1797 = vmatmul.mubr.bf16.gmra.mrb[0].mxu0 %v1717
    %v1798 = vpop.f32.mrb[0].mxu0
    %v1799 = vadd.f32 %v1697, %v1798
    %v1800 = vpop.f32.mrb[0].mxu0
    %v1801 = vpop.f32.mrb[0].mxu0
    %v1802 = vadd.f32 %v1697, %v1801
    %v1803 = vpop.f32.mrb[0].mxu0
    %1804 = vmatprep.mubr.bf16.mxu0 0
    %1805 = vmatmul.mubr.bf16.gmra.mrb[0].mxu0 %v1720
    %v1806 = vpop.f32.mrb[0].mxu0
    %v1807 = vadd.f32 %v1697, %v1806
    %v1808 = vpop.f32.mrb[0].mxu0
    %v1809 = vpop.f32.mrb[0].mxu0
    %v1810 = vadd.f32 %v1697, %v1809
    %v1811 = vpop.f32.mrb[0].mxu0
    %1812 = vmatprep.mubr.bf16.mxu0 0
    %1813 = vmatmul.mubr.bf16.gmra.mrb[0].mxu0 %v1723
    %v1814 = vpop.f32.mrb[0].mxu0
    %v1815 = vadd.f32 %v1697, %v1814
    %v1816 = vpop.f32.mrb[0].mxu0
    %v1817 = vpop.f32.mrb[0].mxu0
    %v1818 = vadd.f32 %v1697, %v1817
    %v1819 = vpop.f32.mrb[0].mxu0
    %1820 = vmatprep.mubr.bf16.mxu0 0
    %1821 = vmatmul.mubr.bf16.gmra.mrb[0].mxu0 %v1726
    %v1822 = vpop.f32.mrb[0].mxu0
    %v1823 = vadd.f32 %v1697, %v1822
    %v1824 = vpop.f32.mrb[0].mxu0
    %v1825 = vpop.f32.mrb[0].mxu0
    %v1826 = vadd.f32 %v1697, %v1825
    %v1827 = vpop.f32.mrb[0].mxu0
    %1828 = vmatprep.mubr.bf16.mxu0 0
    %1829 = vmatmul.mubr.bf16.gmra.mrb[0].mxu0 %v1729
    %v1830 = vpop.f32.mrb[0].mxu0
    %v1831 = vadd.f32 %v1697, %v1830
    %v1832 = vpop.f32.mrb[0].mxu0
    %v1833 = vpop.f32.mrb[0].mxu0
    %v1834 = vadd.f32 %v1697, %v1833
    %v1835 = vpop.f32.mrb[0].mxu0
    %1836 = vmatprep.mubr.bf16.mxu0 0
    %1837 = vmatmul.mubr.bf16.gmra.mrb[0].mxu0 %v1732
    %v1838 = vpop.f32.mrb[0].mxu0
    %v1839 = vadd.f32 %v1697, %v1838
    %v1840 = vpop.f32.mrb[0].mxu0
    %v1841 = vpop.f32.mrb[0].mxu0
    %v1842 = vadd.f32 %v1697, %v1841
    %v1843 = vpop.f32.mrb[0].mxu0
    %1844 = vmatprep.mubr.bf16.mxu0 0
    %1845 = vmatmul.mubr.bf16.gmra.mrb[0].mxu0 %v1735
    %v1846 = vpop.f32.mrb[0].mxu0
    %v1847 = vadd.f32 %v1697, %v1846
    %v1848 = vpop.f32.mrb[0].mxu0
    %v1849 = vpop.f32.mrb[0].mxu0
    %v1850 = vadd.f32 %v1697, %v1849
    %v1851 = vpop.f32.mrb[0].mxu0
    %1852 = vmatprep.mubr.bf16.mxu0 0
    %1853 = vmatmul.mubr.bf16.gmra.mrb[0].mxu0 %v1738
    %v1854 = vpop.f32.mrb[0].mxu0
    %v1855 = vadd.f32 %v1697, %v1854
    %v1856 = vpop.f32.mrb[0].mxu0
    %v1857 = vpop.f32.mrb[0].mxu0
    %v1858 = vadd.f32 %v1697, %v1857
    %v1859 = vpop.f32.mrb[0].mxu0
    %1860 = vmatprep.mubr.bf16.mxu0 0
    %1861 = vmatmul.mubr.bf16.gmra.mrb[0].mxu0 %v1741
    %v1862 = vpop.f32.mrb[0].mxu0
    %v1863 = vadd.f32 %v1697, %v1862
    %v1864 = vpop.f32.mrb[0].mxu0
    %v1865 = vpop.f32.mrb[0].mxu0
    %v1866 = vadd.f32 %v1697, %v1865
    %v1867 = vpop.f32.mrb[0].mxu0
    %1868 = vmatprep.mubr.bf16.mxu0 0
    %1869 = vmatmul.mubr.bf16.gmra.mrb[0].mxu0 %v1744
    %v1870 = vpop.f32.mrb[0].mxu0
    %v1871 = vadd.f32 %v1697, %v1870
    %v1872 = vpop.f32.mrb[0].mxu0
    %v1873 = vpop.f32.mrb[0].mxu0
    %v1874 = vadd.f32 %v1697, %v1873
    %v1875 = vpop.f32.mrb[0].mxu0
    %1876 = vmatprep.mubr.bf16.mxu0 0
    %1877 = vmatmul.mubr.bf16.gmra.mrb[0].mxu0 %v1747
    %v1878 = vpop.f32.mrb[0].mxu0
    %v1879 = vadd.f32 %v1697, %v1878
    %v1880 = vpop.f32.mrb[0].mxu0
    %v1881 = vpop.f32.mrb[0].mxu0
    %v1882 = vadd.f32 %v1697, %v1881
    %v1883 = vpop.f32.mrb[0].mxu0
    %1884 = vmatprep.mubr.bf16.mxu0 0
    %1885 = vmatmul.mubr.bf16.gmra.mrb[0].mxu0 %v1750
    %v1886 = vpop.f32.mrb[0].mxu0
    %v1887 = vadd.f32 %v1697, %v1886
    %v1888 = vpop.f32.mrb[0].mxu0
    %v1889 = vpop.f32.mrb[0].mxu0
    %v1890 = vadd.f32 %v1697, %v1889
    %v1891 = vpop.f32.mrb[0].mxu0
    %1892 = vmatprep.mubr.bf16.mxu0 0
    %1893 = vmatmul.mubr.bf16.gmra.mrb[0].mxu0 %v1753
    %v1894 = vpop.f32.mrb[0].mxu0
    %v1895 = vadd.f32 %v1697, %v1894
    %v1896 = vpop.f32.mrb[0].mxu0
    %v1897 = vpop.f32.mrb[0].mxu0
    %v1898 = vadd.f32 %v1697, %v1897
    %v1899 = vpop.f32.mrb[0].mxu0
    %1900 = vmatprep.mubr.bf16.mxu0 0
    %1901 = vmatmul.mubr.bf16.gmra.mrb[0].mxu0 %v1756
    %v1902 = vpop.f32.mrb[0].mxu0
    %v1903 = vadd.f32 %v1697, %v1902
    %v1904 = vpop.f32.mrb[0].mxu0
    %v1905 = vpop.f32.mrb[0].mxu0
    %v1906 = vadd.f32 %v1697, %v1905
    %v1907 = vpop.f32.mrb[0].mxu0
    %1908 = vmatprep.mubr.bf16.mxu0 0
    %1909 = vmatmul.mubr.bf16.gmra.mrb[0].mxu0 %v1759
    %v1910 = vpop.f32.mrb[0].mxu0
    %v1911 = vadd.f32 %v1697, %v1910
    %v1912 = vpop.f32.mrb[0].mxu0
    %v1913 = vpop.f32.mrb[0].mxu0
    %v1914 = vadd.f32 %v1697, %v1913
    %v1915 = vpop.f32.mrb[0].mxu0
    %1916 = vmatprep.mubr.bf16.mxu0 0
    %1917 = vmatmul.mubr.bf16.gmra.mrb[0].mxu0 %v1762
    %v1918 = vpop.f32.mrb[0].mxu0
    %v1919 = vadd.f32 %v1697, %v1918
    %v1920 = vpop.f32.mrb[0].mxu0
    %v1921 = vpop.f32.mrb[0].mxu0
    %v1922 = vadd.f32 %v1697, %v1921
    %v1923 = vpop.f32.mrb[0].mxu0
    %1924 = vdwg.mxu0
    %v1925 = vmax.f32 %v1799, 0.0
    %v1926 = vmax.f32 %v1802, 0.0
    %v1927 = vmax.f32 %v1807, 0.0
    %v1928 = vmax.f32 %v1810, 0.0
    %v1929 = vmax.f32 %v1815, 0.0
    %v1930 = vmax.f32 %v1818, 0.0
    %v1931 = vmax.f32 %v1823, 0.0
    %v1932 = vmax.f32 %v1826, 0.0
    %v1933 = vmax.f32 %v1831, 0.0
    %v1934 = vmax.f32 %v1834, 0.0
    %v1935 = vmax.f32 %v1839, 0.0
    %v1936 = vmax.f32 %v1842, 0.0
    %v1937 = vmax.f32 %v1847, 0.0
    %v1938 = vmax.f32 %v1850, 0.0
    %v1939 = vmax.f32 %v1855, 0.0
    %v1940 = vmax.f32 %v1858, 0.0
    %v1941 = vmax.f32 %v1863, 0.0
    %v1942 = vmax.f32 %v1866, 0.0
    %v1943 = vmax.f32 %v1871, 0.0
    %v1944 = vmax.f32 %v1874, 0.0
    %v1945 = vmax.f32 %v1879, 0.0
    %v1946 = vmax.f32 %v1882, 0.0
    %v1947 = vmax.f32 %v1887, 0.0
    %v1948 = vmax.f32 %v1890, 0.0
    %v1949 = vmax.f32 %v1895, 0.0
    %v1950 = vmax.f32 %v1898, 0.0
    %v1951 = vmax.f32 %v1903, 0.0
    %v1952 = vmax.f32 %v1906, 0.0
    %v1953 = vmax.f32 %v1911, 0.0
    %v1954 = vmax.f32 %v1914, 0.0
    %v1955 = vmax.f32 %v1919, 0.0
    %v1956 = vmax.f32 %v1922, 0.0
    %v1957 = vpack.c.bf16 %v1926, %v1925
    %v1958 = vpack.c.bf16 %v1928, %v1927
    %v1959 = vpack.c.bf16 %v1930, %v1929
    %v1960 = vpack.c.bf16 %v1932, %v1931
    %v1961 = vpack.c.bf16 %v1934, %v1933
    %v1962 = vpack.c.bf16 %v1936, %v1935
    %v1963 = vpack.c.bf16 %v1938, %v1937
    %v1964 = vpack.c.bf16 %v1940, %v1939
    %v1965 = vpack.c.bf16 %v1942, %v1941
    %v1966 = vpack.c.bf16 %v1944, %v1943
    %v1967 = vpack.c.bf16 %v1946, %v1945
    %v1968 = vpack.c.bf16 %v1948, %v1947
    %v1969 = vpack.c.bf16 %v1950, %v1949
    %v1970 = vpack.c.bf16 %v1952, %v1951
    %v1971 = vpack.c.bf16 %v1954, %v1953
    %v1972 = vpack.c.bf16 %v1956, %v1955
    %v1973 = vld [vmem:[#allocation2 + $0x1e8] sm:$0xf]
    %v1974 = vld [vmem:[#allocation2 + $0x1f0] sm:$0xf]
    %v1975 = vld [vmem:[#allocation2 + $0x1f8] sm:$0xf]
    %v1976 = vld [vmem:[#allocation2 + $0x200] sm:$0xf]
    %v1977 = vld [vmem:[#allocation2 + $0x208] sm:$0xf]
    %v1978 = vld [vmem:[#allocation2 + $0x210] sm:$0xf]
    %v1979 = vld [vmem:[#allocation2 + $0x218] sm:$0xf]
    %v1980 = vld [vmem:[#allocation2 + $0x220] sm:$0xf]
    %v1981 = vld [vmem:[%s2 + $0x6] ss:$0 sm:$0xff]
    %v1990 = vunpack.c.l.b16 %v1973
    %v1991 = vunpack.c.l.b16 %v1974
    %v1992 = vunpack.c.l.b16 %v1975
    %v1993 = vunpack.c.l.b16 %v1976
    %v1994 = vunpack.c.l.b16 %v1977
    %v1995 = vunpack.c.l.b16 %v1978
    %v1996 = vunpack.c.l.b16 %v1979
    %v1997 = vunpack.c.l.b16 %v1980
    %v1998 = vpack.c.b16 %v1991, %v1990
    %v1999 = vpack.c.b16 %v1993, %v1992
    %v2000 = vpack.c.b16 %v1995, %v1994
    %v2001 = vpack.c.b16 %v1997, %v1996
    %v2007 = vsel %vm875, %v1957, 0
    %v2010 = vsel %vm875, %v1958, 0
    %v2013 = vsel %vm875, %v1959, 0
    %v2016 = vsel %vm875, %v1960, 0
    %v2019 = vsel %vm875, %v1961, 0
    %v2022 = vsel %vm875, %v1962, 0
    %v2025 = vsel %vm875, %v1963, 0
    %v2028 = vsel %vm875, %v1964, 0
    %v2031 = vsel %vm875, %v1965, 0
    %v2034 = vsel %vm875, %v1966, 0
    %v2037 = vsel %vm875, %v1967, 0
    %v2040 = vsel %vm875, %v1968, 0
    %v2043 = vsel %vm875, %v1969, 0
    %v2046 = vsel %vm875, %v1970, 0
    %v2049 = vsel %vm875, %v1971, 0
    %v2052 = vsel %vm875, %v1972, 0
    %2054 = vmatprep.subr.bf16.mxu0 0
    %2055 = vmatpush1.bf16.msra.mxu0 %v1998
    %2056 = vmatprep.subr.bf16.mxu0 0
    %2057 = vmatpush1.bf16.msra.mxu0 %v1999
    %2058 = vmatprep.subr.bf16.mxu0 0
    %2059 = vmatpush1.bf16.msra.mxu0 %v2000
    %2060 = vmatprep.subr.bf16.mxu0 0
    %2061 = vmatpush1.bf16.msra.mxu0 %v2001
    %2062 = vmatprep.subr.bf16.mxu0 0
    %2063 = vmatpush1.bf16.msra.mxu0 0
    %2064 = vmatprep.subr.bf16.mxu0 0
    %2065 = vmatpush1.bf16.msra.mxu0 0
    %2066 = vmatprep.subr.bf16.mxu0 0
    %2067 = vmatpush1.bf16.msra.mxu0 0
    %2068 = vmatprep.subr.bf16.mxu0 0
    %2069 = vmatpush1.bf16.msra.mxu0 0
    %2070 = vmatprep.subr.bf16.mxu0 0
    %2071 = vmatpush1.bf16.msra.mxu0 0
    %2072 = vmatprep.subr.bf16.mxu0 0
    %2073 = vmatpush1.bf16.msra.mxu0 0
    %2074 = vmatprep.subr.bf16.mxu0 0
    %2075 = vmatpush1.bf16.msra.mxu0 0
    %2076 = vmatprep.subr.bf16.mxu0 0
    %2077 = vmatpush1.bf16.msra.mxu0 0
    %2078 = vmatprep.subr.bf16.mxu0 0
    %2079 = vmatpush1.bf16.msra.mxu0 0
    %2080 = vmatprep.subr.bf16.mxu0 0
    %2081 = vmatpush1.bf16.msra.mxu0 0
    %2082 = vmatprep.subr.bf16.mxu0 0
    %2083 = vmatpush1.bf16.msra.mxu0 0
    %2084 = vmatprep.subr.bf16.mxu0 0
    %2085 = vmatpush1.bf16.msra.mxu0 0
    %2086 = vmatprep.mubr.bf16.mxu0 0
    %2087 = vmatmul.mubr.bf16.gmra.mrb[0].mxu0 %v2007
    %v2088 = vpop.f32.mrb[0].mxu0
    %v2089 = vadd.f32 %v1981, %v2088
    %v2090 = vpop.f32.mrb[0].mxu0
    %v2091 = vpop.f32.mrb[0].mxu0
    %v2092 = vadd.f32 %v1981, %v2091
    %v2093 = vpop.f32.mrb[0].mxu0
    %2094 = vmatprep.mubr.bf16.mxu0 0
    %2095 = vmatmul.mubr.bf16.gmra.mrb[0].mxu0 %v2010
    %v2096 = vpop.f32.mrb[0].mxu0
    %v2097 = vadd.f32 %v1981, %v2096
    %v2098 = vpop.f32.mrb[0].mxu0
    %v2099 = vpop.f32.mrb[0].mxu0
    %v2100 = vadd.f32 %v1981, %v2099
    %v2101 = vpop.f32.mrb[0].mxu0
    %2102 = vmatprep.mubr.bf16.mxu0 0
    %2103 = vmatmul.mubr.bf16.gmra.mrb[0].mxu0 %v2013
    %v2104 = vpop.f32.mrb[0].mxu0
    %v2105 = vadd.f32 %v1981, %v2104
    %v2106 = vpop.f32.mrb[0].mxu0
    %v2107 = vpop.f32.mrb[0].mxu0
    %v2108 = vadd.f32 %v1981, %v2107
    %v2109 = vpop.f32.mrb[0].mxu0
    %2110 = vmatprep.mubr.bf16.mxu0 0
    %2111 = vmatmul.mubr.bf16.gmra.mrb[0].mxu0 %v2016
    %v2112 = vpop.f32.mrb[0].mxu0
    %v2113 = vadd.f32 %v1981, %v2112
    %v2114 = vpop.f32.mrb[0].mxu0
    %v2115 = vpop.f32.mrb[0].mxu0
    %v2116 = vadd.f32 %v1981, %v2115
    %v2117 = vpop.f32.mrb[0].mxu0
    %2118 = vmatprep.mubr.bf16.mxu0 0
    %2119 = vmatmul.mubr.bf16.gmra.mrb[0].mxu0 %v2019
    %v2120 = vpop.f32.mrb[0].mxu0
    %v2121 = vadd.f32 %v1981, %v2120
    %v2122 = vpop.f32.mrb[0].mxu0
    %v2123 = vpop.f32.mrb[0].mxu0
    %v2124 = vadd.f32 %v1981, %v2123
    %v2125 = vpop.f32.mrb[0].mxu0
    %2126 = vmatprep.mubr.bf16.mxu0 0
    %2127 = vmatmul.mubr.bf16.gmra.mrb[0].mxu0 %v2022
    %v2128 = vpop.f32.mrb[0].mxu0
    %v2129 = vadd.f32 %v1981, %v2128
    %v2130 = vpop.f32.mrb[0].mxu0
    %v2131 = vpop.f32.mrb[0].mxu0
    %v2132 = vadd.f32 %v1981, %v2131
    %v2133 = vpop.f32.mrb[0].mxu0
    %2134 = vmatprep.mubr.bf16.mxu0 0
    %2135 = vmatmul.mubr.bf16.gmra.mrb[0].mxu0 %v2025
    %v2136 = vpop.f32.mrb[0].mxu0
    %v2137 = vadd.f32 %v1981, %v2136
    %v2138 = vpop.f32.mrb[0].mxu0
    %v2139 = vpop.f32.mrb[0].mxu0
    %v2140 = vadd.f32 %v1981, %v2139
    %v2141 = vpop.f32.mrb[0].mxu0
    %2142 = vmatprep.mubr.bf16.mxu0 0
    %2143 = vmatmul.mubr.bf16.gmra.mrb[0].mxu0 %v2028
    %v2144 = vpop.f32.mrb[0].mxu0
    %v2145 = vadd.f32 %v1981, %v2144
    %v2146 = vpop.f32.mrb[0].mxu0
    %v2147 = vpop.f32.mrb[0].mxu0
    %v2148 = vadd.f32 %v1981, %v2147
    %v2149 = vpop.f32.mrb[0].mxu0
    %2150 = vmatprep.mubr.bf16.mxu0 0
    %2151 = vmatmul.mubr.bf16.gmra.mrb[0].mxu0 %v2031
    %v2152 = vpop.f32.mrb[0].mxu0
    %v2153 = vadd.f32 %v1981, %v2152
    %v2154 = vpop.f32.mrb[0].mxu0
    %v2155 = vpop.f32.mrb[0].mxu0
    %v2156 = vadd.f32 %v1981, %v2155
    %v2157 = vpop.f32.mrb[0].mxu0
    %2158 = vmatprep.mubr.bf16.mxu0 0
    %2159 = vmatmul.mubr.bf16.gmra.mrb[0].mxu0 %v2034
    %v2160 = vpop.f32.mrb[0].mxu0
    %v2161 = vadd.f32 %v1981, %v2160
    %v2162 = vpop.f32.mrb[0].mxu0
    %v2163 = vpop.f32.mrb[0].mxu0
    %v2164 = vadd.f32 %v1981, %v2163
    %v2165 = vpop.f32.mrb[0].mxu0
    %2166 = vmatprep.mubr.bf16.mxu0 0
    %2167 = vmatmul.mubr.bf16.gmra.mrb[0].mxu0 %v2037
    %v2168 = vpop.f32.mrb[0].mxu0
    %v2169 = vadd.f32 %v1981, %v2168
    %v2170 = vpop.f32.mrb[0].mxu0
    %v2171 = vpop.f32.mrb[0].mxu0
    %v2172 = vadd.f32 %v1981, %v2171
    %v2173 = vpop.f32.mrb[0].mxu0
    %2174 = vmatprep.mubr.bf16.mxu0 0
    %2175 = vmatmul.mubr.bf16.gmra.mrb[0].mxu0 %v2040
    %v2176 = vpop.f32.mrb[0].mxu0
    %v2177 = vadd.f32 %v1981, %v2176
    %v2178 = vpop.f32.mrb[0].mxu0
    %v2179 = vpop.f32.mrb[0].mxu0
    %v2180 = vadd.f32 %v1981, %v2179
    %v2181 = vpop.f32.mrb[0].mxu0
    %2182 = vmatprep.mubr.bf16.mxu0 0
    %2183 = vmatmul.mubr.bf16.gmra.mrb[0].mxu0 %v2043
    %v2184 = vpop.f32.mrb[0].mxu0
    %v2185 = vadd.f32 %v1981, %v2184
    %v2186 = vpop.f32.mrb[0].mxu0
    %v2187 = vpop.f32.mrb[0].mxu0
    %v2188 = vadd.f32 %v1981, %v2187
    %v2189 = vpop.f32.mrb[0].mxu0
    %2190 = vmatprep.mubr.bf16.mxu0 0
    %2191 = vmatmul.mubr.bf16.gmra.mrb[0].mxu0 %v2046
    %v2192 = vpop.f32.mrb[0].mxu0
    %v2193 = vadd.f32 %v1981, %v2192
    %v2194 = vpop.f32.mrb[0].mxu0
    %v2195 = vpop.f32.mrb[0].mxu0
    %v2196 = vadd.f32 %v1981, %v2195
    %v2197 = vpop.f32.mrb[0].mxu0
    %2198 = vmatprep.mubr.bf16.mxu0 0
    %2199 = vmatmul.mubr.bf16.gmra.mrb[0].mxu0 %v2049
    %v2200 = vpop.f32.mrb[0].mxu0
    %v2201 = vadd.f32 %v1981, %v2200
    %v2202 = vpop.f32.mrb[0].mxu0
    %v2203 = vpop.f32.mrb[0].mxu0
    %v2204 = vadd.f32 %v1981, %v2203
    %v2205 = vpop.f32.mrb[0].mxu0
    %2206 = vmatprep.mubr.bf16.mxu0 0
    %2207 = vmatmul.mubr.bf16.gmra.mrb[0].mxu0 %v2052
    %v2208 = vpop.f32.mrb[0].mxu0
    %v2209 = vadd.f32 %v1981, %v2208
    %v2210 = vpop.f32.mrb[0].mxu0
    %v2211 = vpop.f32.mrb[0].mxu0
    %v2212 = vadd.f32 %v1981, %v2211
    %v2213 = vpop.f32.mrb[0].mxu0
    %2214 = vdwg.mxu0
    %v2215 = vmax.f32 %v2089, 0.0
    %v2216 = vmax.f32 %v2092, 0.0
    %v2217 = vmax.f32 %v2097, 0.0
    %v2218 = vmax.f32 %v2100, 0.0
    %v2219 = vmax.f32 %v2105, 0.0
    %v2220 = vmax.f32 %v2108, 0.0
    %v2221 = vmax.f32 %v2113, 0.0
    %v2222 = vmax.f32 %v2116, 0.0
    %v2223 = vmax.f32 %v2121, 0.0
    %v2224 = vmax.f32 %v2124, 0.0
    %v2225 = vmax.f32 %v2129, 0.0
    %v2226 = vmax.f32 %v2132, 0.0
    %v2227 = vmax.f32 %v2137, 0.0
    %v2228 = vmax.f32 %v2140, 0.0
    %v2229 = vmax.f32 %v2145, 0.0
    %v2230 = vmax.f32 %v2148, 0.0
    %v2231 = vmax.f32 %v2153, 0.0
    %v2232 = vmax.f32 %v2156, 0.0
    %v2233 = vmax.f32 %v2161, 0.0
    %v2234 = vmax.f32 %v2164, 0.0
    %v2235 = vmax.f32 %v2169, 0.0
    %v2236 = vmax.f32 %v2172, 0.0
    %v2237 = vmax.f32 %v2177, 0.0
    %v2238 = vmax.f32 %v2180, 0.0
    %v2239 = vmax.f32 %v2185, 0.0
    %v2240 = vmax.f32 %v2188, 0.0
    %v2241 = vmax.f32 %v2193, 0.0
    %v2242 = vmax.f32 %v2196, 0.0
    %v2243 = vmax.f32 %v2201, 0.0
    %v2244 = vmax.f32 %v2204, 0.0
    %v2245 = vmax.f32 %v2209, 0.0
    %v2246 = vmax.f32 %v2212, 0.0
    %v2247 = vpack.c.bf16 %v2216, %v2215
    %v2248 = vpack.c.bf16 %v2218, %v2217
    %v2249 = vpack.c.bf16 %v2220, %v2219
    %v2250 = vpack.c.bf16 %v2222, %v2221
    %v2251 = vpack.c.bf16 %v2224, %v2223
    %v2252 = vpack.c.bf16 %v2226, %v2225
    %v2253 = vpack.c.bf16 %v2228, %v2227
    %v2254 = vpack.c.bf16 %v2230, %v2229
    %v2255 = vpack.c.bf16 %v2232, %v2231
    %v2256 = vpack.c.bf16 %v2234, %v2233
    %v2257 = vpack.c.bf16 %v2236, %v2235
    %v2258 = vpack.c.bf16 %v2238, %v2237
    %v2259 = vpack.c.bf16 %v2240, %v2239
    %v2260 = vpack.c.bf16 %v2242, %v2241
    %v2261 = vpack.c.bf16 %v2244, %v2243
    %v2262 = vpack.c.bf16 %v2246, %v2245
    %v2263 = vld [vmem:[#allocation2 + $0x228] sm:$0xff]
    %v2264 = vld [vmem:[#allocation2 + $0x230] sm:$0xff]
    %v2265 = vld [vmem:[#allocation2 + $0x238] sm:$0xff]
    %v2266 = vld [vmem:[#allocation2 + $0x240] sm:$0xff]
    %v2267 = vld [vmem:[#allocation2 + $0x248] sm:$0x33]
    %s2268 = scalar_lea.vmem %s2, 7
    %v2269 = vld [vmem:[%s2268] ss:$8 sm:$0x3]
    %v2271 = vlaneseq
    %v2272 = vshrl.u32 %v2271, 7
    %v2273 = vsub.s32 0, %v2272
    %v2274 = vrot.slane %v2269, %v2273
    %v2275 = vlaneseq
    %v2276 = vshrl.u32 %v2275, 7
    %v2277 = vsub.s32 1, %v2276
    %v2278 = vrot.slane %v2269, %v2277
    %v2286 = vunpack.c.l.b16 %v2263
    %v2287 = vunpack.c.h.b16 %v2263
    %v2288 = vunpack.c.l.b16 %v2264
    %v2289 = vunpack.c.h.b16 %v2264
    %v2290 = vunpack.c.l.b16 %v2265
    %v2291 = vunpack.c.h.b16 %v2265
    %v2292 = vunpack.c.l.b16 %v2266
    %v2293 = vunpack.c.h.b16 %v2266
    %v2294 = vunpack.c.l.b16 %v2267
    %v2295 = vunpack.c.h.b16 %v2267
    %v2296 = vpack.c.b16 %v2288, %v2286
    %v2297 = vpack.c.b16 %v2289, %v2287
    %v2298 = vpack.c.b16 %v2292, %v2290
    %v2299 = vpack.c.b16 %v2293, %v2291
    %v2300 = vpack.c.b16 %v2294, %v2294
    %v2301 = vpack.c.b16 %v2295, %v2295
    %v2307 = vsel %vm580, %v2247, 0
    %v2310 = vsel %vm580, %v2248, 0
    %v2313 = vsel %vm580, %v2249, 0
    %v2316 = vsel %vm580, %v2250, 0
    %v2319 = vsel %vm580, %v2251, 0
    %v2322 = vsel %vm580, %v2252, 0
    %v2325 = vsel %vm580, %v2253, 0
    %v2328 = vsel %vm580, %v2254, 0
    %v2331 = vsel %vm629, %v2300, 0
    %v2334 = vsel %vm629, %v2301, 0
    %2336 = vmatprep.subr.bf16.mxu0 %v2297
    %2337 = vmatpush1.bf16.msra.mxu0 %v2296
    %2338 = vmatprep.subr.bf16.mxu0 %v2299
    %2339 = vmatpush1.bf16.msra.mxu0 %v2298
    %2340 = vmatprep.subr.bf16.mxu0 %v2334
    %2341 = vmatpush1.bf16.msra.mxu0 %v2331
    %2342 = vmatprep.subr.bf16.mxu0 0
    %2343 = vmatpush1.bf16.msra.mxu0 0
    %2344 = vmatprep.subr.bf16.mxu0 0
    %2345 = vmatpush1.bf16.msra.mxu0 0
    %2346 = vmatprep.subr.bf16.mxu0 0
    %2347 = vmatpush1.bf16.msra.mxu0 0
    %2348 = vmatprep.subr.bf16.mxu0 0
    %2349 = vmatpush1.bf16.msra.mxu0 0
    %2350 = vmatprep.subr.bf16.mxu0 0
    %2351 = vmatpush1.bf16.msra.mxu0 0
    %2352 = vmatprep.subr.bf16.mxu0 0
    %2353 = vmatpush1.bf16.msra.mxu0 0
    %2354 = vmatprep.subr.bf16.mxu0 0
    %2355 = vmatpush1.bf16.msra.mxu0 0
    %2356 = vmatprep.subr.bf16.mxu0 0
    %2357 = vmatpush1.bf16.msra.mxu0 0
    %2358 = vmatprep.subr.bf16.mxu0 0
    %2359 = vmatpush1.bf16.msra.mxu0 0
    %2360 = vmatprep.subr.bf16.mxu0 0
    %2361 = vmatpush1.bf16.msra.mxu0 0
    %2362 = vmatprep.subr.bf16.mxu0 0
    %2363 = vmatpush1.bf16.msra.mxu0 0
    %2364 = vmatprep.subr.bf16.mxu0 0
    %2365 = vmatpush1.bf16.msra.mxu0 0
    %2366 = vmatprep.subr.bf16.mxu0 0
    %2367 = vmatpush1.bf16.msra.mxu0 0
    %2368 = vmatprep.mubr.bf16.mxu0 0
    %2369 = vmatmul.mubr.bf16.gmra.mrb[0].mxu0 %v2307
    %v2370 = vpop.f32.mrb[0].mxu0
    %v2371 = vadd.f32 %v2274, %v2370
    %v2372 = vpop.f32.mrb[0].mxu0
    %v2373 = vadd.f32 %v2278, %v2372
    %v2374 = vpop.f32.mrb[0].mxu0
    %v2375 = vadd.f32 %v2274, %v2374
    %v2376 = vpop.f32.mrb[0].mxu0
    %v2377 = vadd.f32 %v2278, %v2376
    %2378 = vmatprep.mubr.bf16.mxu0 0
    %2379 = vmatmul.mubr.bf16.gmra.mrb[0].mxu0 %v2310
    %v2380 = vpop.f32.mrb[0].mxu0
    %v2381 = vadd.f32 %v2274, %v2380
    %v2382 = vpop.f32.mrb[0].mxu0
    %v2383 = vadd.f32 %v2278, %v2382
    %v2384 = vpop.f32.mrb[0].mxu0
    %v2385 = vadd.f32 %v2274, %v2384
    %v2386 = vpop.f32.mrb[0].mxu0
    %v2387 = vadd.f32 %v2278, %v2386
    %2388 = vmatprep.mubr.bf16.mxu0 0
    %2389 = vmatmul.mubr.bf16.gmra.mrb[0].mxu0 %v2313
    %v2390 = vpop.f32.mrb[0].mxu0
    %v2391 = vadd.f32 %v2274, %v2390
    %v2392 = vpop.f32.mrb[0].mxu0
    %v2393 = vadd.f32 %v2278, %v2392
    %v2394 = vpop.f32.mrb[0].mxu0
    %v2395 = vadd.f32 %v2274, %v2394
    %v2396 = vpop.f32.mrb[0].mxu0
    %v2397 = vadd.f32 %v2278, %v2396
    %2398 = vmatprep.mubr.bf16.mxu0 0
    %2399 = vmatmul.mubr.bf16.gmra.mrb[0].mxu0 %v2316
    %v2400 = vpop.f32.mrb[0].mxu0
    %v2401 = vadd.f32 %v2274, %v2400
    %v2402 = vpop.f32.mrb[0].mxu0
    %v2403 = vadd.f32 %v2278, %v2402
    %v2404 = vpop.f32.mrb[0].mxu0
    %v2405 = vadd.f32 %v2274, %v2404
    %v2406 = vpop.f32.mrb[0].mxu0
    %v2407 = vadd.f32 %v2278, %v2406
    %2408 = vmatprep.mubr.bf16.mxu0 0
    %2409 = vmatmul.mubr.bf16.gmra.mrb[0].mxu0 %v2319
    %v2410 = vpop.f32.mrb[0].mxu0
    %v2411 = vadd.f32 %v2274, %v2410
    %v2412 = vpop.f32.mrb[0].mxu0
    %v2413 = vadd.f32 %v2278, %v2412
    %v2414 = vpop.f32.mrb[0].mxu0
    %v2415 = vadd.f32 %v2274, %v2414
    %v2416 = vpop.f32.mrb[0].mxu0
    %v2417 = vadd.f32 %v2278, %v2416
    %2418 = vmatprep.mubr.bf16.mxu0 0
    %2419 = vmatmul.mubr.bf16.gmra.mrb[0].mxu0 %v2322
    %v2420 = vpop.f32.mrb[0].mxu0
    %v2421 = vadd.f32 %v2274, %v2420
    %v2422 = vpop.f32.mrb[0].mxu0
    %v2423 = vadd.f32 %v2278, %v2422
    %v2424 = vpop.f32.mrb[0].mxu0
    %v2425 = vadd.f32 %v2274, %v2424
    %v2426 = vpop.f32.mrb[0].mxu0
    %v2427 = vadd.f32 %v2278, %v2426
    %2428 = vmatprep.mubr.bf16.mxu0 0
    %2429 = vmatmul.mubr.bf16.gmra.mrb[0].mxu0 %v2325
    %v2430 = vpop.f32.mrb[0].mxu0
    %v2431 = vadd.f32 %v2274, %v2430
    %v2432 = vpop.f32.mrb[0].mxu0
    %v2433 = vadd.f32 %v2278, %v2432
    %v2434 = vpop.f32.mrb[0].mxu0
    %v2435 = vadd.f32 %v2274, %v2434
    %v2436 = vpop.f32.mrb[0].mxu0
    %v2437 = vadd.f32 %v2278, %v2436
    %2438 = vmatprep.mubr.bf16.mxu0 0
    %2439 = vmatmul.mubr.bf16.gmra.mrb[0].mxu0 %v2328
    %v2440 = vpop.f32.mrb[0].mxu0
    %v2441 = vadd.f32 %v2274, %v2440
    %v2442 = vpop.f32.mrb[0].mxu0
    %v2443 = vadd.f32 %v2278, %v2442
    %v2444 = vpop.f32.mrb[0].mxu0
    %v2445 = vadd.f32 %v2274, %v2444
    %v2446 = vpop.f32.mrb[0].mxu0
    %v2447 = vadd.f32 %v2278, %v2446
    %2448 = vdwg.mxu0
    %2449 = vst [vmem:[%s3] sm:$0xff] %v2371
    %2450 = vst [vmem:[%s3 + $0x8] sm:$0xff] %v2373
    %2451 = vst [vmem:[%s3 + $0x10] sm:$0xff] %v2375
    %2452 = vst [vmem:[%s3 + $0x18] sm:$0xff] %v2377
    %2453 = vst [vmem:[%s3 + $0x20] sm:$0xff] %v2381
    %2454 = vst [vmem:[%s3 + $0x28] sm:$0xff] %v2383
    %2455 = vst [vmem:[%s3 + $0x30] sm:$0xff] %v2385
    %2456 = vst [vmem:[%s3 + $0x38] sm:$0xff] %v2387
    %2457 = vst [vmem:[%s3 + $0x40] sm:$0xff] %v2391
    %2458 = vst [vmem:[%s3 + $0x48] sm:$0xff] %v2393
    %2459 = vst [vmem:[%s3 + $0x50] sm:$0xff] %v2395
    %2460 = vst [vmem:[%s3 + $0x58] sm:$0xff] %v2397
    %2461 = vst [vmem:[%s3 + $0x60] sm:$0xff] %v2401
    %2462 = vst [vmem:[%s3 + $0x68] sm:$0xff] %v2403
    %2463 = vst [vmem:[%s3 + $0x70] sm:$0xff] %v2405
    %2464 = vst [vmem:[%s3 + $0x78] sm:$0xff] %v2407
    %2465 = vst [vmem:[%s3 + $0x80] sm:$0xff] %v2411
    %2466 = vst [vmem:[%s3 + $0x88] sm:$0xff] %v2413
    %2467 = vst [vmem:[%s3 + $0x90] sm:$0xff] %v2415
    %2468 = vst [vmem:[%s3 + $0x98] sm:$0xff] %v2417
    %2469 = vst [vmem:[%s3 + $0xa0] sm:$0xff] %v2421
    %2470 = vst [vmem:[%s3 + $0xa8] sm:$0xff] %v2423
    %2471 = vst [vmem:[%s3 + $0xb0] sm:$0xff] %v2425
    %2472 = vst [vmem:[%s3 + $0xb8] sm:$0xff] %v2427
    %2473 = vst [vmem:[%s3 + $0xc0] sm:$0xff] %v2431
    %2474 = vst [vmem:[%s3 + $0xc8] sm:$0xff] %v2433
    %2475 = vst [vmem:[%s3 + $0xd0] sm:$0xff] %v2435
    %2476 = vst [vmem:[%s3 + $0xd8] sm:$0xff] %v2437
    %2477 = vst [vmem:[%s3 + $0xe0] sm:$0xff] %v2441
    %2478 = vst [vmem:[%s3 + $0xe8] sm:$0xff] %v2443
    %2479 = vst [vmem:[%s3 + $0xf0] sm:$0xff] %v2445
    %2480 = vst [vmem:[%s3 + $0xf8] sm:$0xff] %v2447
    %v2481 = vld [vmem:[#allocation2 + $0x228] sm:$0xff]
    %v2482 = vld [vmem:[#allocation2 + $0x230] sm:$0xff]
    %v2483 = vld [vmem:[#allocation2 + $0x238] sm:$0xff]
    %v2484 = vld [vmem:[#allocation2 + $0x240] sm:$0xff]
    %v2485 = vld [vmem:[#allocation2 + $0x248] sm:$0x33]
    %v2486 = vld [vmem:[%s2268] ss:$8 sm:$0x3]
    %v2488 = vlaneseq
    %v2489 = vshrl.u32 %v2488, 7
    %v2490 = vsub.s32 0, %v2489
    %v2491 = vrot.slane %v2486, %v2490
    %v2492 = vlaneseq
    %v2493 = vshrl.u32 %v2492, 7
    %v2494 = vsub.s32 1, %v2493
    %v2495 = vrot.slane %v2486, %v2494
    %v2503 = vunpack.c.l.b16 %v2481
    %v2504 = vunpack.c.h.b16 %v2481
    %v2505 = vunpack.c.l.b16 %v2482
    %v2506 = vunpack.c.h.b16 %v2482
    %v2507 = vunpack.c.l.b16 %v2483
    %v2508 = vunpack.c.h.b16 %v2483
    %v2509 = vunpack.c.l.b16 %v2484
    %v2510 = vunpack.c.h.b16 %v2484
    %v2511 = vunpack.c.l.b16 %v2485
    %v2512 = vunpack.c.h.b16 %v2485
    %v2513 = vpack.c.b16 %v2505, %v2503
    %v2514 = vpack.c.b16 %v2506, %v2504
    %v2515 = vpack.c.b16 %v2509, %v2507
    %v2516 = vpack.c.b16 %v2510, %v2508
    %v2517 = vpack.c.b16 %v2511, %v2511
    %v2518 = vpack.c.b16 %v2512, %v2512
    %v2524 = vsel %vm580, %v2255, 0
    %v2527 = vsel %vm580, %v2256, 0
    %v2530 = vsel %vm580, %v2257, 0
    %v2533 = vsel %vm580, %v2258, 0
    %v2536 = vsel %vm580, %v2259, 0
    %v2539 = vsel %vm580, %v2260, 0
    %v2542 = vsel %vm580, %v2261, 0
    %v2545 = vsel %vm580, %v2262, 0
    %v2548 = vsel %vm629, %v2517, 0
    %v2551 = vsel %vm629, %v2518, 0
    %2553 = vmatprep.subr.bf16.mxu0 %v2514
    %2554 = vmatpush1.bf16.msra.mxu0 %v2513
    %2555 = vmatprep.subr.bf16.mxu0 %v2516
    %2556 = vmatpush1.bf16.msra.mxu0 %v2515
    %2557 = vmatprep.subr.bf16.mxu0 %v2551
    %2558 = vmatpush1.bf16.msra.mxu0 %v2548
    %2559 = vmatprep.subr.bf16.mxu0 0
    %2560 = vmatpush1.bf16.msra.mxu0 0
    %2561 = vmatprep.subr.bf16.mxu0 0
    %2562 = vmatpush1.bf16.msra.mxu0 0
    %2563 = vmatprep.subr.bf16.mxu0 0
    %2564 = vmatpush1.bf16.msra.mxu0 0
    %2565 = vmatprep.subr.bf16.mxu0 0
    %2566 = vmatpush1.bf16.msra.mxu0 0
    %2567 = vmatprep.subr.bf16.mxu0 0
    %2568 = vmatpush1.bf16.msra.mxu0 0
    %2569 = vmatprep.subr.bf16.mxu0 0
    %2570 = vmatpush1.bf16.msra.mxu0 0
    %2571 = vmatprep.subr.bf16.mxu0 0
    %2572 = vmatpush1.bf16.msra.mxu0 0
    %2573 = vmatprep.subr.bf16.mxu0 0
    %2574 = vmatpush1.bf16.msra.mxu0 0
    %2575 = vmatprep.subr.bf16.mxu0 0
    %2576 = vmatpush1.bf16.msra.mxu0 0
    %2577 = vmatprep.subr.bf16.mxu0 0
    %2578 = vmatpush1.bf16.msra.mxu0 0
    %2579 = vmatprep.subr.bf16.mxu0 0
    %2580 = vmatpush1.bf16.msra.mxu0 0
    %2581 = vmatprep.subr.bf16.mxu0 0
    %2582 = vmatpush1.bf16.msra.mxu0 0
    %2583 = vmatprep.subr.bf16.mxu0 0
    %2584 = vmatpush1.bf16.msra.mxu0 0
    %2585 = vmatprep.mubr.bf16.mxu0 0
    %2586 = vmatmul.mubr.bf16.gmra.mrb[0].mxu0 %v2524
    %v2587 = vpop.f32.mrb[0].mxu0
    %v2588 = vadd.f32 %v2491, %v2587
    %v2589 = vpop.f32.mrb[0].mxu0
    %v2590 = vadd.f32 %v2495, %v2589
    %v2591 = vpop.f32.mrb[0].mxu0
    %v2592 = vadd.f32 %v2491, %v2591
    %v2593 = vpop.f32.mrb[0].mxu0
    %v2594 = vadd.f32 %v2495, %v2593
    %2595 = vmatprep.mubr.bf16.mxu0 0
    %2596 = vmatmul.mubr.bf16.gmra.mrb[0].mxu0 %v2527
    %v2597 = vpop.f32.mrb[0].mxu0
    %v2598 = vadd.f32 %v2491, %v2597
    %v2599 = vpop.f32.mrb[0].mxu0
    %v2600 = vadd.f32 %v2495, %v2599
    %v2601 = vpop.f32.mrb[0].mxu0
    %v2602 = vadd.f32 %v2491, %v2601
    %v2603 = vpop.f32.mrb[0].mxu0
    %v2604 = vadd.f32 %v2495, %v2603
    %2605 = vmatprep.mubr.bf16.mxu0 0
    %2606 = vmatmul.mubr.bf16.gmra.mrb[0].mxu0 %v2530
    %v2607 = vpop.f32.mrb[0].mxu0
    %v2608 = vadd.f32 %v2491, %v2607
    %v2609 = vpop.f32.mrb[0].mxu0
    %v2610 = vadd.f32 %v2495, %v2609
    %v2611 = vpop.f32.mrb[0].mxu0
    %v2612 = vadd.f32 %v2491, %v2611
    %v2613 = vpop.f32.mrb[0].mxu0
    %v2614 = vadd.f32 %v2495, %v2613
    %2615 = vmatprep.mubr.bf16.mxu0 0
    %2616 = vmatmul.mubr.bf16.gmra.mrb[0].mxu0 %v2533
    %v2617 = vpop.f32.mrb[0].mxu0
    %v2618 = vadd.f32 %v2491, %v2617
    %v2619 = vpop.f32.mrb[0].mxu0
    %v2620 = vadd.f32 %v2495, %v2619
    %v2621 = vpop.f32.mrb[0].mxu0
    %v2622 = vadd.f32 %v2491, %v2621
    %v2623 = vpop.f32.mrb[0].mxu0
    %v2624 = vadd.f32 %v2495, %v2623
    %2625 = vmatprep.mubr.bf16.mxu0 0
    %2626 = vmatmul.mubr.bf16.gmra.mrb[0].mxu0 %v2536
    %v2627 = vpop.f32.mrb[0].mxu0
    %v2628 = vadd.f32 %v2491, %v2627
    %v2629 = vpop.f32.mrb[0].mxu0
    %v2630 = vadd.f32 %v2495, %v2629
    %v2631 = vpop.f32.mrb[0].mxu0
    %v2632 = vadd.f32 %v2491, %v2631
    %v2633 = vpop.f32.mrb[0].mxu0
    %v2634 = vadd.f32 %v2495, %v2633
    %2635 = vmatprep.mubr.bf16.mxu0 0
    %2636 = vmatmul.mubr.bf16.gmra.mrb[0].mxu0 %v2539
    %v2637 = vpop.f32.mrb[0].mxu0
    %v2638 = vadd.f32 %v2491, %v2637
    %v2639 = vpop.f32.mrb[0].mxu0
    %v2640 = vadd.f32 %v2495, %v2639
    %v2641 = vpop.f32.mrb[0].mxu0
    %v2642 = vadd.f32 %v2491, %v2641
    %v2643 = vpop.f32.mrb[0].mxu0
    %v2644 = vadd.f32 %v2495, %v2643
    %2645 = vmatprep.mubr.bf16.mxu0 0
    %2646 = vmatmul.mubr.bf16.gmra.mrb[0].mxu0 %v2542
    %v2647 = vpop.f32.mrb[0].mxu0
    %v2648 = vadd.f32 %v2491, %v2647
    %v2649 = vpop.f32.mrb[0].mxu0
    %v2650 = vadd.f32 %v2495, %v2649
    %v2651 = vpop.f32.mrb[0].mxu0
    %v2652 = vadd.f32 %v2491, %v2651
    %v2653 = vpop.f32.mrb[0].mxu0
    %v2654 = vadd.f32 %v2495, %v2653
    %2655 = vmatprep.mubr.bf16.mxu0 0
    %2656 = vmatmul.mubr.bf16.gmra.mrb[0].mxu0 %v2545
    %v2657 = vpop.f32.mrb[0].mxu0
    %v2658 = vadd.f32 %v2491, %v2657
    %v2659 = vpop.f32.mrb[0].mxu0
    %v2660 = vadd.f32 %v2495, %v2659
    %v2661 = vpop.f32.mrb[0].mxu0
    %v2662 = vadd.f32 %v2491, %v2661
    %v2663 = vpop.f32.mrb[0].mxu0
    %v2664 = vadd.f32 %v2495, %v2663
    %2665 = vdwg.mxu0
    %2666 = vst [vmem:[%s3 + $0x100] sm:$0xff] %v2588
    %2667 = vst [vmem:[%s3 + $0x108] sm:$0xff] %v2590
    %2668 = vst [vmem:[%s3 + $0x110] sm:$0xff] %v2592
    %2669 = vst [vmem:[%s3 + $0x118] sm:$0xff] %v2594
    %2670 = vst [vmem:[%s3 + $0x120] sm:$0xff] %v2598
    %2671 = vst [vmem:[%s3 + $0x128] sm:$0xff] %v2600
    %2672 = vst [vmem:[%s3 + $0x130] sm:$0xff] %v2602
    %2673 = vst [vmem:[%s3 + $0x138] sm:$0xff] %v2604
    %2674 = vst [vmem:[%s3 + $0x140] sm:$0xff] %v2608
    %2675 = vst [vmem:[%s3 + $0x148] sm:$0xff] %v2610
    %2676 = vst [vmem:[%s3 + $0x150] sm:$0xff] %v2612
    %2677 = vst [vmem:[%s3 + $0x158] sm:$0xff] %v2614
    %2678 = vst [vmem:[%s3 + $0x160] sm:$0xff] %v2618
    %2679 = vst [vmem:[%s3 + $0x168] sm:$0xff] %v2620
    %2680 = vst [vmem:[%s3 + $0x170] sm:$0xff] %v2622
    %2681 = vst [vmem:[%s3 + $0x178] sm:$0xff] %v2624
    %2682 = vst [vmem:[%s3 + $0x180] sm:$0xff] %v2628
    %2683 = vst [vmem:[%s3 + $0x188] sm:$0xff] %v2630
    %2684 = vst [vmem:[%s3 + $0x190] sm:$0xff] %v2632
    %2685 = vst [vmem:[%s3 + $0x198] sm:$0xff] %v2634
    %2686 = vst [vmem:[%s3 + $0x1a0] sm:$0xff] %v2638
    %2687 = vst [vmem:[%s3 + $0x1a8] sm:$0xff] %v2640
    %2688 = vst [vmem:[%s3 + $0x1b0] sm:$0xff] %v2642
    %2689 = vst [vmem:[%s3 + $0x1b8] sm:$0xff] %v2644
    %2690 = vst [vmem:[%s3 + $0x1c0] sm:$0xff] %v2648
    %2691 = vst [vmem:[%s3 + $0x1c8] sm:$0xff] %v2650
    %2692 = vst [vmem:[%s3 + $0x1d0] sm:$0xff] %v2652
    %2693 = vst [vmem:[%s3 + $0x1d8] sm:$0xff] %v2654
    %2694 = vst [vmem:[%s3 + $0x1e0] sm:$0xff] %v2658
    %2695 = vst [vmem:[%s3 + $0x1e8] sm:$0xff] %v2660
    %2696 = vst [vmem:[%s3 + $0x1f0] sm:$0xff] %v2662
    %2697 = vst [vmem:[%s3 + $0x1f8] sm:$0xff] %v2664
    // Predicated region
    $region18: #{forward.1} parent=1 // pred_check
      _
    $region19: #{forward.1} parent=1 // pred_check_branch
      %2699 = sbr.rel (0) target = $region21
    $region20: #{forward.1} parent=1 // pred_region
      _
    $region21: #{forward.1} parent=1 // pred_fallthru
      _
    // Predicated region
    $region22: #{forward.1} parent=1 // pred_check
      _
    $region23: #{forward.1} parent=1 // pred_check_branch
      %2701 = sbr.rel (0) target = $region25
    $region24: #{forward.1} parent=1 // pred_region
      _
    $region25: #{forward.1} parent=1 // pred_fallthru
      _
    %2702 = vsyncpa [#allocation3], 1

</llo_original>
